<compile_context>
chip_gen: v6e
topology: v6e:2x2x1
jax: 0.10.0
libtpu: 0.0.40
codegen_flags: <defaults>
</compile_context>

<pallas_src>
import jax
import jax.numpy as jnp
from jax.experimental import pallas as pl
from jax.experimental.pallas import tpu as pltpu

IMG_SIZE = (1, 28, 28)
IN_DIM = 1 * 28 * 28          # 784
K_PAD = 896                   # 7 * 128  (lane-dense K for the first matmul)
N_PAD = 128                   # lane-dense output width (true output is col 0)
TB_MAX = 512                  # batch tile (rows) per grid step


def _round_up(x, m):
    return ((x + m - 1) // m) * m


def discriminator_kernel(x_ref,
                         w1_ref, b1_ref,
                         w2_ref, b2_ref,
                         w3_ref, b3_ref,
                         w4_ref, b4_ref,
                         o_ref):
    # x_ref: (TB, 896) bf16; weights bf16; biases f32; o_ref: (TB, 128) f32.
    x = x_ref[...]

    # L1: (TB,896) @ (896,512) -> f32 accumulate, bias/ReLU in f32.
    h = jnp.dot(x, w1_ref[...], preferred_element_type=jnp.float32) + b1_ref[...]
    h = jnp.maximum(h, 0.0).astype(jnp.bfloat16)

    # L2: 512 -> 256
    h = jnp.dot(h, w2_ref[...], preferred_element_type=jnp.float32) + b2_ref[...]
    h = jnp.maximum(h, 0.0).astype(jnp.bfloat16)

    # L3: 256 -> 128
    h = jnp.dot(h, w3_ref[...], preferred_element_type=jnp.float32) + b3_ref[...]
    h = jnp.maximum(h, 0.0).astype(jnp.bfloat16)

    # L4: 128 -> 128 (true out_features=1 lives in column 0; cols 1..127 are
    # zero-weight padding so the store stays lane-dense).
    h = jnp.dot(h, w4_ref[...], preferred_element_type=jnp.float32) + b4_ref[...]
    h = jnp.maximum(h, 0.0)                         # ReLU (before sigmoid, per module)

    o_ref[...] = (1.0 / (1.0 + jnp.exp(-h))).astype(o_ref.dtype)   # Sigmoid (EUP)


def discriminator_forward(x, params):
    """x: (B, 1, 28, 28) float32 -> (B, 1) float32."""
    b = x.shape[0]
    (w1, b1), (w2, b2), (w3, b3), (w4, b4) = params

    # ---- layout / dtype prep in the wrapper (pure plumbing, no extra compute) ----
    # Batch tile: multiple of 8 sublanes, capped at TB_MAX; batch padded up to it.
    tb = min(TB_MAX, _round_up(b, 8))
    b_pad = _round_up(b, tb)
    grid = (b_pad // tb,)

    # Flatten exactly like torch `x.reshape(B, -1)`, lane-pad K 784->896,
    # row-pad batch, and cast the dominant byte stream (x) to bf16.
    x_flat = x.reshape(b, -1).astype(jnp.float32)
    x_pad = jnp.zeros((b_pad, K_PAD), jnp.bfloat16)
    x_pad = x_pad.at[:b, :IN_DIM].set(x_flat.astype(jnp.bfloat16))

    # Weights: (in, out) layout, bf16 for the MXU; K-pad w1, N-pad w4/b4 with zeros.
    w1p = jnp.zeros((K_PAD, 512), jnp.bfloat16).at[:IN_DIM, :].set(w1.astype(jnp.bfloat16))
    w2p = w2.astype(jnp.bfloat16)                     # (512, 256)
    w3p = w3.astype(jnp.bfloat16)                     # (256, 128)
    w4p = jnp.zeros((128, N_PAD), jnp.bfloat16).at[:, :1].set(w4.astype(jnp.bfloat16))
    b1p = b1.astype(jnp.float32)                      # (1, 512)
    b2p = b2.astype(jnp.float32)                      # (1, 256)
    b3p = b3.astype(jnp.float32)                      # (1, 128)
    b4p = jnp.zeros((1, N_PAD), jnp.float32).at[:, :1].set(b4.astype(jnp.float32))

    const = lambda shape: pl.BlockSpec(shape, lambda i: (0, 0))  # VMEM-resident

    out_pad = pl.pallas_call(
        discriminator_kernel,
        out_shape=jax.ShapeDtypeStruct((b_pad, N_PAD), jnp.float32),
        grid=grid,
        in_specs=[
            pl.BlockSpec((tb, K_PAD), lambda i: (i, 0)),   # x tile (double-buffered)
            const((K_PAD, 512)), const((1, 512)),          # w1, b1
            const((512, 256)),   const((1, 256)),          # w2, b2
            const((256, 128)),   const((1, 128)),          # w3, b3
            const((128, N_PAD)), const((1, N_PAD)),        # w4, b4
        ],
        out_specs=pl.BlockSpec((tb, N_PAD), lambda i: (i, 0)),
        compiler_params=pltpu.CompilerParams(
            dimension_semantics=("parallel",)),
    )(x_pad, w1p, b1p, w2p, b2p, w3p, b3p, w4p, b4p)

    # Slice away batch padding and the lane padding of the final layer.
    return out_pad[:b, :1]


def init_params(key):
    """Deterministic parameter init; weights as (in, out), biases as (1, out)."""
    dims = [(IN_DIM, 512), (512, 256), (256, 128), (128, 1)]
    params = []
    for i, (fan_in, fan_out) in enumerate(dims):
        kw, kb, key = jax.random.split(jax.random.fold_in(key, i), 3)
        bound = 1.0 / jnp.sqrt(fan_in)  # PyTorch nn.Linear default init range
        w = jax.random.uniform(kw, (fan_in, fan_out), jnp.float32, -bound, bound)
        bias = jax.random.uniform(kb, (1, fan_out), jnp.float32, -bound, bound)
        params.append((w, bias))
    return params


if __name__ == "__main__":
    key = jax.random.PRNGKey(0)
    k_x, k_p = jax.random.split(key)

    batch = 2
    x = jax.random.normal(k_x, (batch,) + IMG_SIZE, dtype=jnp.float32)
    params = init_params(k_p)

    out = discriminator_forward(x, params)
    out = jax.block_until_ready(out)

    # Reference in plain JAX f32 (same math). Kernel uses bf16 matmul inputs,
    # so compare with a loose tolerance.
    def ref_forward(x, params):
        h = x.reshape(x.shape[0], -1)
        for (w, bias) in params:
            h = jnp.maximum(h @ w + bias, 0.0)
        return 1.0 / (1.0 + jnp.exp(-h))

    ref = ref_forward(x, params)
    assert out.shape == (batch, 1), out.shape
    assert jnp.allclose(out, ref, atol=5e-2, rtol=5e-2), (out, ref)

    print("KERNEL_OK")
</pallas_src>

<mosaic_0001>
module attributes {stable_mosaic.version = 11 : i64} {
  func.func @discriminator_kernel(%arg0: i32, %arg1: memref<8x896xbf16, #tpu.memory_space<vmem>>, %arg2: memref<896x512xbf16, #tpu.memory_space<vmem>>, %arg3: memref<1x512xf32, #tpu.memory_space<vmem>>, %arg4: memref<512x256xbf16, #tpu.memory_space<vmem>>, %arg5: memref<1x256xf32, #tpu.memory_space<vmem>>, %arg6: memref<256x128xbf16, #tpu.memory_space<vmem>>, %arg7: memref<1x128xf32, #tpu.memory_space<vmem>>, %arg8: memref<128x128xbf16, #tpu.memory_space<vmem>>, %arg9: memref<1x128xf32, #tpu.memory_space<vmem>>, %arg10: memref<8x128xf32, #tpu.memory_space<vmem>>) attributes {dimension_semantics = [#tpu.dimension_semantics<parallel>], iteration_bounds = array<i64: 1>, scalar_prefetch = 0 : i64, scratch_operands = 0 : i64, tpu.core_type = #tpu.core_type<tc>, window_params = [{transform_indices = @transform_0, window_bounds = array<i64: 8, 896>}, {pipeline_mode = #tpu.pipeline_mode<synchronous>, transform_indices = @transform_1, window_bounds = array<i64: 896, 512>}, {pipeline_mode = #tpu.pipeline_mode<synchronous>, transform_indices = @transform_2, window_bounds = array<i64: 1, 512>}, {pipeline_mode = #tpu.pipeline_mode<synchronous>, transform_indices = @transform_3, window_bounds = array<i64: 512, 256>}, {pipeline_mode = #tpu.pipeline_mode<synchronous>, transform_indices = @transform_4, window_bounds = array<i64: 1, 256>}, {pipeline_mode = #tpu.pipeline_mode<synchronous>, transform_indices = @transform_5, window_bounds = array<i64: 256, 128>}, {pipeline_mode = #tpu.pipeline_mode<synchronous>, transform_indices = @transform_6, window_bounds = array<i64: 1, 128>}, {pipeline_mode = #tpu.pipeline_mode<synchronous>, transform_indices = @transform_7, window_bounds = array<i64: 128, 128>}, {pipeline_mode = #tpu.pipeline_mode<synchronous>, transform_indices = @transform_8, window_bounds = array<i64: 1, 128>}, {transform_indices = @transform_9, window_bounds = array<i64: 8, 128>}]} {
    %c0 = arith.constant 0 : index
    %c0_0 = arith.constant 0 : index
    %0 = vector.load %arg1[%c0, %c0_0] : memref<8x896xbf16, #tpu.memory_space<vmem>>, vector<8x896xbf16>
    %c0_1 = arith.constant 0 : index
    %c0_2 = arith.constant 0 : index
    %1 = vector.load %arg2[%c0_1, %c0_2] : memref<896x512xbf16, #tpu.memory_space<vmem>>, vector<896x512xbf16>
    %cst = arith.constant dense<0.000000e+00> : vector<8x512xf32>
    %2 = tpu.matmul %0, %1, %cst {dimension_numbers = #tpu.dot_dimension_numbers<[1], [0], [0], [1], [0, 0, 1, 1], [], []>} : vector<8x896xbf16>, vector<896x512xbf16>, vector<8x512xf32> -> vector<8x512xf32>
    %c0_3 = arith.constant 0 : index
    %c0_4 = arith.constant 0 : index
    %3 = vector.load %arg3[%c0_3, %c0_4] : memref<1x512xf32, #tpu.memory_space<vmem>>, vector<1x512xf32>
    %4 = vector.broadcast %3 : vector<1x512xf32> to vector<8x512xf32>
    %5 = arith.addf %2, %4 : vector<8x512xf32>
    %cst_5 = arith.constant 0.000000e+00 : f32
    %6 = vector.broadcast %cst_5 : f32 to vector<8x512xf32>
    %7 = arith.maximumf %5, %6 : vector<8x512xf32>
    %8 = arith.truncf %7 : vector<8x512xf32> to vector<8x512xbf16>
    %c0_6 = arith.constant 0 : index
    %c0_7 = arith.constant 0 : index
    %9 = vector.load %arg4[%c0_6, %c0_7] : memref<512x256xbf16, #tpu.memory_space<vmem>>, vector<512x256xbf16>
    %cst_8 = arith.constant dense<0.000000e+00> : vector<8x256xf32>
    %10 = tpu.matmul %8, %9, %cst_8 {dimension_numbers = #tpu.dot_dimension_numbers<[1], [0], [0], [1], [0, 0, 1, 1], [], []>} : vector<8x512xbf16>, vector<512x256xbf16>, vector<8x256xf32> -> vector<8x256xf32>
    %c0_9 = arith.constant 0 : index
    %c0_10 = arith.constant 0 : index
    %11 = vector.load %arg5[%c0_9, %c0_10] : memref<1x256xf32, #tpu.memory_space<vmem>>, vector<1x256xf32>
    %12 = vector.broadcast %11 : vector<1x256xf32> to vector<8x256xf32>
    %13 = arith.addf %10, %12 : vector<8x256xf32>
    %cst_11 = arith.constant 0.000000e+00 : f32
    %14 = vector.broadcast %cst_11 : f32 to vector<8x256xf32>
    %15 = arith.maximumf %13, %14 : vector<8x256xf32>
    %16 = arith.truncf %15 : vector<8x256xf32> to vector<8x256xbf16>
    %c0_12 = arith.constant 0 : index
    %c0_13 = arith.constant 0 : index
    %17 = vector.load %arg6[%c0_12, %c0_13] : memref<256x128xbf16, #tpu.memory_space<vmem>>, vector<256x128xbf16>
    %cst_14 = arith.constant dense<0.000000e+00> : vector<8x128xf32>
    %18 = tpu.matmul %16, %17, %cst_14 {dimension_numbers = #tpu.dot_dimension_numbers<[1], [0], [0], [1], [0, 0, 1, 1], [], []>} : vector<8x256xbf16>, vector<256x128xbf16>, vector<8x128xf32> -> vector<8x128xf32>
    %c0_15 = arith.constant 0 : index
    %c0_16 = arith.constant 0 : index
    %19 = vector.load %arg7[%c0_15, %c0_16] : memref<1x128xf32, #tpu.memory_space<vmem>>, vector<1x128xf32>
    %20 = vector.broadcast %19 : vector<1x128xf32> to vector<8x128xf32>
    %21 = arith.addf %18, %20 : vector<8x128xf32>
    %cst_17 = arith.constant 0.000000e+00 : f32
    %22 = vector.broadcast %cst_17 : f32 to vector<8x128xf32>
    %23 = arith.maximumf %21, %22 : vector<8x128xf32>
    %24 = arith.truncf %23 : vector<8x128xf32> to vector<8x128xbf16>
    %c0_18 = arith.constant 0 : index
    %c0_19 = arith.constant 0 : index
    %25 = vector.load %arg8[%c0_18, %c0_19] : memref<128x128xbf16, #tpu.memory_space<vmem>>, vector<128x128xbf16>
    %cst_20 = arith.constant dense<0.000000e+00> : vector<8x128xf32>
    %26 = tpu.matmul %24, %25, %cst_20 {dimension_numbers = #tpu.dot_dimension_numbers<[1], [0], [0], [1], [0, 0, 1, 1], [], []>} : vector<8x128xbf16>, vector<128x128xbf16>, vector<8x128xf32> -> vector<8x128xf32>
    %c0_21 = arith.constant 0 : index
    %c0_22 = arith.constant 0 : index
    %27 = vector.load %arg9[%c0_21, %c0_22] : memref<1x128xf32, #tpu.memory_space<vmem>>, vector<1x128xf32>
    %28 = vector.broadcast %27 : vector<1x128xf32> to vector<8x128xf32>
    %29 = arith.addf %26, %28 : vector<8x128xf32>
    %cst_23 = arith.constant 0.000000e+00 : f32
    %30 = vector.broadcast %cst_23 : f32 to vector<8x128xf32>
    %31 = arith.maximumf %29, %30 : vector<8x128xf32>
    %cst_24 = arith.constant 0.000000e+00 : f32
    %32 = vector.broadcast %cst_24 : f32 to vector<8x128xf32>
    %33 = arith.subf %32, %31 : vector<8x128xf32>
    %34 = math.exp %33 : vector<8x128xf32>
    %cst_25 = arith.constant 1.000000e+00 : f32
    %35 = vector.broadcast %cst_25 : f32 to vector<8x128xf32>
    %36 = arith.addf %35, %34 : vector<8x128xf32>
    %cst_26 = arith.constant 1.000000e+00 : f32
    %37 = vector.broadcast %cst_26 : f32 to vector<8x128xf32>
    %38 = arith.divf %37, %36 : vector<8x128xf32>
    %c0_27 = arith.constant 0 : index
    %c0_28 = arith.constant 0 : index
    %39 = vector.load %arg10[%c0_27, %c0_28] : memref<8x128xf32, #tpu.memory_space<vmem>>, vector<8x128xf32>
    tpu.vector_store %arg10[%c0_27, %c0_28], %38 {strides = array<i32>} : memref<8x128xf32, #tpu.memory_space<vmem>>, vector<8x128xf32>,
    return
  }
  func.func @transform_0(%arg0: i32) -> (i32, i32) {
    %c0_i32 = arith.constant 0 : i32
    %c0_i32_0 = arith.constant 0 : i32
    return %arg0, %c0_i32 : i32, i32
  }
  func.func @transform_1(%arg0: i32) -> (i32, i32) {
    %c0_i32 = arith.constant 0 : i32
    %c0_i32_0 = arith.constant 0 : i32
    %c0_i32_1 = arith.constant 0 : i32
    return %c0_i32, %c0_i32_0 : i32, i32
  }
  func.func @transform_2(%arg0: i32) -> (i32, i32) {
    %c0_i32 = arith.constant 0 : i32
    %c0_i32_0 = arith.constant 0 : i32
    %c0_i32_1 = arith.constant 0 : i32
    return %c0_i32, %c0_i32_0 : i32, i32
  }
  func.func @transform_3(%arg0: i32) -> (i32, i32) {
    %c0_i32 = arith.constant 0 : i32
    %c0_i32_0 = arith.constant 0 : i32
    %c0_i32_1 = arith.constant 0 : i32
    return %c0_i32, %c0_i32_0 : i32, i32
  }
  func.func @transform_4(%arg0: i32) -> (i32, i32) {
    %c0_i32 = arith.constant 0 : i32
    %c0_i32_0 = arith.constant 0 : i32
    %c0_i32_1 = arith.constant 0 : i32
    return %c0_i32, %c0_i32_0 : i32, i32
  }
  func.func @transform_5(%arg0: i32) -> (i32, i32) {
    %c0_i32 = arith.constant 0 : i32
    %c0_i32_0 = arith.constant 0 : i32
    %c0_i32_1 = arith.constant 0 : i32
    return %c0_i32, %c0_i32_0 : i32, i32
  }
  func.func @transform_6(%arg0: i32) -> (i32, i32) {
    %c0_i32 = arith.constant 0 : i32
    %c0_i32_0 = arith.constant 0 : i32
    %c0_i32_1 = arith.constant 0 : i32
    return %c0_i32, %c0_i32_0 : i32, i32
  }
  func.func @transform_7(%arg0: i32) -> (i32, i32) {
    %c0_i32 = arith.constant 0 : i32
    %c0_i32_0 = arith.constant 0 : i32
    %c0_i32_1 = arith.constant 0 : i32
    return %c0_i32, %c0_i32_0 : i32, i32
  }
  func.func @transform_8(%arg0: i32) -> (i32, i32) {
    %c0_i32 = arith.constant 0 : i32
    %c0_i32_0 = arith.constant 0 : i32
    %c0_i32_1 = arith.constant 0 : i32
    return %c0_i32, %c0_i32_0 : i32, i32
  }
  func.func @transform_9(%arg0: i32) -> (i32, i32) {
    %c0_i32 = arith.constant 0 : i32
    %c0_i32_0 = arith.constant 0 : i32
    return %arg0, %c0_i32 : i32, i32
  }
}

</mosaic_0001>

<llo_original>
// kernel: tpu_custom_call.1
$region0: #{tpu_custom_call.1}
  #allocation0 [shape = 'u32[]', space=smem, size = 0x4, offset = 0x4, fixed_abs, tag = 'smem constant byte address 0x4 - core index']
  #allocation1 [shape = 'u32[144,128]{1,0:T(1,128)}', space=vmem, size = 0x12000, scoped, tag = 'internal scratch']
  %s0 = inlined_call_operand.hbm [shape: bf16[8,896], index: 0, kind: input, shape index: {}]
  %s1 = inlined_call_operand.hbm [shape: bf16[896,512], index: 1, kind: input, shape index: {}]
  %s2 = inlined_call_operand.hbm [shape: f32[1,512], index: 2, kind: input, shape index: {}]
  %s3 = inlined_call_operand.hbm [shape: bf16[512,256], index: 3, kind: input, shape index: {}]
  %s4 = inlined_call_operand.vmem [shape: f32[1,256], index: 4, kind: input, shape index: {}]
  %s5 = inlined_call_operand.hbm [shape: bf16[256,128], index: 5, kind: input, shape index: {}]
  %s6 = inlined_call_operand.vmem [shape: f32[1,128], index: 6, kind: input, shape index: {}]
  %s7 = inlined_call_operand.hbm [shape: bf16[128,128], index: 7, kind: input, shape index: {}]
  %s8 = inlined_call_operand.vmem [shape: f32[1,128], index: 8, kind: input, shape index: {}]
  %s9 = inlined_call_operand.hbm [shape: f32[8,128], index: 9, kind: output, shape index: {}]
  %s10 = sld [smem:[#allocation0]]
  $region70: #{tpu_custom_call.1} parent=0
    _
  %s12 = ssub.s32 1, %s10
  %s13 = scalar_select 0, %s12, %s10
  $region1: #{tpu_custom_call.1} parent=0
    #allocation2 [shape = 'u8[14336]{0}', space=vmem, size = 0x3800, scoped, tag = 'input window, operand 0, single buffered']
    #allocation3 [shape = 's32[1]{0}', space=sflag, size = 0x4, scoped, tag = 'scoped memory for tpu_custom_call.1']
    #allocation4 [shape = 's32[1]{0}', space=sflag, size = 0x4, scoped, tag = 'scoped memory for tpu_custom_call.1']
    #allocation5 [shape = 'u8[917504]{0}', space=vmem, size = 0xe0000, scoped, tag = 'input window, operand 1, single buffered']
    #allocation6 [shape = 's32[1]{0}', space=sflag, size = 0x4, scoped, tag = 'scoped memory for tpu_custom_call.1']
    #allocation7 [shape = 'u8[2048]{0}', space=vmem, size = 0x800, scoped, tag = 'input window, operand 2, single buffered']
    #allocation8 [shape = 'u8[262144]{0}', space=vmem, size = 0x40000, scoped, tag = 'input window, operand 3, single buffered']
    #allocation9 [shape = 's32[1]{0}', space=sflag, size = 0x4, scoped, tag = 'scoped memory for tpu_custom_call.1']
    #allocation10 [shape = 'u8[65536]{0}', space=vmem, size = 0x10000, scoped, tag = 'input window, operand 5, single buffered']
    #allocation11 [shape = 'u8[32768]{0}', space=vmem, size = 0x8000, scoped, tag = 'input window, operand 7, single buffered']
    #allocation12 [shape = 's32[1]{0}', space=sflag, size = 0x4, scoped, tag = 'scoped memory for tpu_custom_call.1']
    #allocation13 [shape = 'u8[4096]{0}', space=vmem, size = 0x1000, scoped, tag = 'output window, operand 0, single buffered']
    %14 = vsyncpa [#allocation3], 0
    %15 = vsyncpa [#allocation6], 0
    %16 = vsyncpa [#allocation9], 0
    %17 = vsyncpa [#allocation12], 0
    %18 = vsyncpa [#allocation4], 0
    // Predicated region
    $region2: #{tpu_custom_call.1} parent=1 // pred_check
      _
    $region3: #{tpu_custom_call.1} parent=1 // pred_check_branch
      %20 = sbr.rel (0) target = $region5
    $region4: #{tpu_custom_call.1} parent=1 // pred_region
      %s22 = ssub.s32 448, 448
      %23 = vsyncadd [#allocation3], %s22
      %s25 = sshll.u32 [#allocation2], 4
      %s26 = int_to_ptr.vmem [resolvable:$true] %s25
      %28 = dma.hbm_to_vmem [thread:$0]  %s0, 448, %s26, [#allocation3]
    $region5: #{tpu_custom_call.1} parent=1 // pred_fallthru
      _
    // Predicated region
    $region6: #{tpu_custom_call.1} parent=1 // pred_check
      _
    $region7: #{tpu_custom_call.1} parent=1 // pred_check_branch
      %30 = sbr.rel (0) target = $region9
    $region8: #{tpu_custom_call.1} parent=1 // pred_region
      %s32 = ssub.s32 28672, 28672
      %33 = vsyncadd [#allocation6], %s32
      %s34 = sshll.u32 [#allocation5], 4
      %s35 = int_to_ptr.vmem [resolvable:$true] %s34
      %40 = dma.hbm_to_vmem [thread:$0]  %s1, 28672, %s35, [#allocation6], 256, 256, 16
    $region9: #{tpu_custom_call.1} parent=1 // pred_fallthru
      _
    // Predicated region
    $region10: #{tpu_custom_call.1} parent=1 // pred_check
      _
    $region11: #{tpu_custom_call.1} parent=1 // pred_check_branch
      %42 = sbr.rel (0) target = $region13
    $region12: #{tpu_custom_call.1} parent=1 // pred_region
      %s44 = ssub.s32 64, 64
      %45 = vsyncadd [#allocation6], %s44
      %s47 = sshll.u32 [#allocation7], 4
      %s48 = int_to_ptr.vmem [resolvable:$true] %s47
      %50 = dma.hbm_to_vmem [thread:$0]  %s2, 64, %s48, [#allocation6]
    $region13: #{tpu_custom_call.1} parent=1 // pred_fallthru
      _
    // Predicated region
    $region14: #{tpu_custom_call.1} parent=1 // pred_check
      _
    $region15: #{tpu_custom_call.1} parent=1 // pred_check_branch
      %52 = sbr.rel (0) target = $region17
    $region16: #{tpu_custom_call.1} parent=1 // pred_region
      %s54 = ssub.s32 8192, 8192
      %55 = vsyncadd [#allocation9], %s54
      %s56 = sshll.u32 [#allocation8], 4
      %s57 = int_to_ptr.vmem [resolvable:$true] %s56
      %62 = dma.hbm_to_vmem [thread:$0]  %s3, 8192, %s57, [#allocation9], 128, 128, 8
    $region17: #{tpu_custom_call.1} parent=1 // pred_fallthru
      _
    // Predicated region
    $region18: #{tpu_custom_call.1} parent=1 // pred_check
      _
    $region19: #{tpu_custom_call.1} parent=1 // pred_check_branch
      %64 = sbr.rel (0) target = $region21
    $region20: #{tpu_custom_call.1} parent=1 // pred_region
      _
    $region21: #{tpu_custom_call.1} parent=1 // pred_fallthru
      _
    // Predicated region
    $region22: #{tpu_custom_call.1} parent=1 // pred_check
      _
    $region23: #{tpu_custom_call.1} parent=1 // pred_check_branch
      %66 = sbr.rel (0) target = $region25
    $region24: #{tpu_custom_call.1} parent=1 // pred_region
      %s68 = ssub.s32 2048, 2048
      %69 = vsyncadd [#allocation9], %s68
      %s70 = sshll.u32 [#allocation10], 4
      %s71 = int_to_ptr.vmem [resolvable:$true] %s70
      %76 = dma.hbm_to_vmem [thread:$0]  %s5, 2048, %s71, [#allocation9], 64, 64, 4
    $region25: #{tpu_custom_call.1} parent=1 // pred_fallthru
      _
    // Predicated region
    $region26: #{tpu_custom_call.1} parent=1 // pred_check
      _
    $region27: #{tpu_custom_call.1} parent=1 // pred_check_branch
      %78 = sbr.rel (0) target = $region29
    $region28: #{tpu_custom_call.1} parent=1 // pred_region
      _
    $region29: #{tpu_custom_call.1} parent=1 // pred_fallthru
      _
    // Predicated region
    $region30: #{tpu_custom_call.1} parent=1 // pred_check
      _
    $region31: #{tpu_custom_call.1} parent=1 // pred_check_branch
      %80 = sbr.rel (0) target = $region33
    $region32: #{tpu_custom_call.1} parent=1 // pred_region
      %s82 = ssub.s32 1024, 1024
      %83 = vsyncadd [#allocation12], %s82
      %s84 = sshll.u32 [#allocation11], 4
      %s85 = int_to_ptr.vmem [resolvable:$true] %s84
      %90 = dma.hbm_to_vmem [thread:$0]  %s7, 1024, %s85, [#allocation12], 64, 64, 4
    $region33: #{tpu_custom_call.1} parent=1 // pred_fallthru
      _
    // Predicated region
    $region34: #{tpu_custom_call.1} parent=1 // pred_check
      _
    $region35: #{tpu_custom_call.1} parent=1 // pred_check_branch
      %92 = sbr.rel (0) target = $region37
    $region36: #{tpu_custom_call.1} parent=1 // pred_region
      _
    $region37: #{tpu_custom_call.1} parent=1 // pred_fallthru
      _
    // Predicated region
    $region38: #{tpu_custom_call.1} parent=1 // pred_check
      _
    $region39: #{tpu_custom_call.1} parent=1 // pred_check_branch
      %94 = sbr.rel (0) target = $region41
    $region40: #{tpu_custom_call.1} parent=1 // pred_region
      %95 = dma.done [#allocation3], 448
    $region41: #{tpu_custom_call.1} parent=1 // pred_fallthru
      _
    // Predicated region
    $region42: #{tpu_custom_call.1} parent=1 // pred_check
      _
    $region43: #{tpu_custom_call.1} parent=1 // pred_check_branch
      %97 = sbr.rel (0) target = $region45
    $region44: #{tpu_custom_call.1} parent=1 // pred_region
      %98 = dma.done [#allocation6], 28672
    $region45: #{tpu_custom_call.1} parent=1 // pred_fallthru
      _
    // Predicated region
    $region46: #{tpu_custom_call.1} parent=1 // pred_check
      _
    $region47: #{tpu_custom_call.1} parent=1 // pred_check_branch
      %100 = sbr.rel (0) target = $region49
    $region48: #{tpu_custom_call.1} parent=1 // pred_region
      %101 = dma.done [#allocation6], 64
    $region49: #{tpu_custom_call.1} parent=1 // pred_fallthru
      _
    // Predicated region
    $region50: #{tpu_custom_call.1} parent=1 // pred_check
      _
    $region51: #{tpu_custom_call.1} parent=1 // pred_check_branch
      %103 = sbr.rel (0) target = $region53
    $region52: #{tpu_custom_call.1} parent=1 // pred_region
      %104 = dma.done [#allocation9], 8192
    $region53: #{tpu_custom_call.1} parent=1 // pred_fallthru
      _
    // Predicated region
    $region54: #{tpu_custom_call.1} parent=1 // pred_check
      _
    $region55: #{tpu_custom_call.1} parent=1 // pred_check_branch
      %106 = sbr.rel (0) target = $region57
    $region56: #{tpu_custom_call.1} parent=1 // pred_region
      %107 = dma.done [#allocation9], 2048
    $region57: #{tpu_custom_call.1} parent=1 // pred_fallthru
      _
    // Predicated region
    $region58: #{tpu_custom_call.1} parent=1 // pred_check
      _
    $region59: #{tpu_custom_call.1} parent=1 // pred_check_branch
      %109 = sbr.rel (0) target = $region61
    $region60: #{tpu_custom_call.1} parent=1 // pred_region
      %110 = dma.done [#allocation12], 1024
    $region61: #{tpu_custom_call.1} parent=1 // pred_fallthru
      _
    %v112 = vld [vmem:[#allocation2] sm:$0xff]
    %v113 = vld [vmem:[#allocation2 + $0x8] sm:$0xff]
    %v114 = vld [vmem:[#allocation2 + $0x10] sm:$0xff]
    %v115 = vld [vmem:[#allocation2 + $0x18] sm:$0xf]
    %v116 = vld [vmem:[#allocation5] sm:$0xff]
    %v117 = vld [vmem:[#allocation5 + $0x8] sm:$0xff]
    %v118 = vld [vmem:[#allocation5 + $0x10] sm:$0xff]
    %v119 = vld [vmem:[#allocation5 + $0x18] sm:$0xff]
    %v120 = vld [vmem:[#allocation5 + $0x20] sm:$0xff]
    %v121 = vld [vmem:[#allocation5 + $0x28] sm:$0xff]
    %v122 = vld [vmem:[#allocation5 + $0x30] sm:$0xff]
    %v123 = vld [vmem:[#allocation5 + $0x38] sm:$0xff]
    %v124 = vld [vmem:[#allocation5 + $0x40] sm:$0xff]
    %v125 = vld [vmem:[#allocation5 + $0x48] sm:$0xff]
    %v126 = vld [vmem:[#allocation5 + $0x50] sm:$0xff]
    %v127 = vld [vmem:[#allocation5 + $0x58] sm:$0xff]
    %v128 = vld [vmem:[#allocation5 + $0x60] sm:$0xff]
    %v129 = vld [vmem:[#allocation5 + $0x68] sm:$0xff]
    %v130 = vld [vmem:[#allocation5 + $0x70] sm:$0xff]
    %v131 = vld [vmem:[#allocation5 + $0x78] sm:$0xff]
    %v132 = vld [vmem:[#allocation5 + $0x80] sm:$0xff]
    %v133 = vld [vmem:[#allocation5 + $0x88] sm:$0xff]
    %v134 = vld [vmem:[#allocation5 + $0x90] sm:$0xff]
    %v135 = vld [vmem:[#allocation5 + $0x98] sm:$0xff]
    %v136 = vld [vmem:[#allocation5 + $0xa0] sm:$0xff]
    %v137 = vld [vmem:[#allocation5 + $0xa8] sm:$0xff]
    %v138 = vld [vmem:[#allocation5 + $0xb0] sm:$0xff]
    %v139 = vld [vmem:[#allocation5 + $0xb8] sm:$0xff]
    %v140 = vld [vmem:[#allocation5 + $0xc0] sm:$0xff]
    %v141 = vld [vmem:[#allocation5 + $0xc8] sm:$0xff]
    %v142 = vld [vmem:[#allocation5 + $0xd0] sm:$0xff]
    %v143 = vld [vmem:[#allocation5 + $0xd8] sm:$0xff]
    %v144 = vld [vmem:[#allocation5 + $0xe0] sm:$0xff]
    %v145 = vld [vmem:[#allocation5 + $0xe8] sm:$0xff]
    %v146 = vld [vmem:[#allocation5 + $0xf0] sm:$0xff]
    %v147 = vld [vmem:[#allocation5 + $0xf8] sm:$0xff]
    %v148 = vld [vmem:[#allocation5 + $0x100] sm:$0xff]
    %v149 = vld [vmem:[#allocation5 + $0x108] sm:$0xff]
    %v150 = vld [vmem:[#allocation5 + $0x110] sm:$0xff]
    %v151 = vld [vmem:[#allocation5 + $0x118] sm:$0xff]
    %v152 = vld [vmem:[#allocation5 + $0x120] sm:$0xff]
    %v153 = vld [vmem:[#allocation5 + $0x128] sm:$0xff]
    %v154 = vld [vmem:[#allocation5 + $0x130] sm:$0xff]
    %v155 = vld [vmem:[#allocation5 + $0x138] sm:$0xff]
    %v156 = vld [vmem:[#allocation5 + $0x140] sm:$0xff]
    %v157 = vld [vmem:[#allocation5 + $0x148] sm:$0xff]
    %v158 = vld [vmem:[#allocation5 + $0x150] sm:$0xff]
    %v159 = vld [vmem:[#allocation5 + $0x158] sm:$0xff]
    %v160 = vld [vmem:[#allocation5 + $0x160] sm:$0xff]
    %v161 = vld [vmem:[#allocation5 + $0x168] sm:$0xff]
    %v162 = vld [vmem:[#allocation5 + $0x170] sm:$0xff]
    %v163 = vld [vmem:[#allocation5 + $0x178] sm:$0xff]
    %v164 = vld [vmem:[#allocation5 + $0x180] sm:$0xff]
    %v165 = vld [vmem:[#allocation5 + $0x188] sm:$0xff]
    %v166 = vld [vmem:[#allocation5 + $0x190] sm:$0xff]
    %v167 = vld [vmem:[#allocation5 + $0x198] sm:$0xff]
    %v168 = vld [vmem:[#allocation5 + $0x1a0] sm:$0xff]
    %v169 = vld [vmem:[#allocation5 + $0x1a8] sm:$0xff]
    %v170 = vld [vmem:[#allocation5 + $0x1b0] sm:$0xff]
    %v171 = vld [vmem:[#allocation5 + $0x1b8] sm:$0xff]
    %v172 = vld [vmem:[#allocation5 + $0x1c0] sm:$0xff]
    %v173 = vld [vmem:[#allocation5 + $0x1c8] sm:$0xff]
    %v174 = vld [vmem:[#allocation5 + $0x1d0] sm:$0xff]
    %v175 = vld [vmem:[#allocation5 + $0x1d8] sm:$0xff]
    %v176 = vld [vmem:[#allocation5 + $0x1e0] sm:$0xff]
    %v177 = vld [vmem:[#allocation5 + $0x1e8] sm:$0xff]
    %v178 = vld [vmem:[#allocation5 + $0x1f0] sm:$0xff]
    %v179 = vld [vmem:[#allocation5 + $0x1f8] sm:$0xff]
    %v180 = vld [vmem:[#allocation5 + $0x200] sm:$0xff]
    %v181 = vld [vmem:[#allocation5 + $0x208] sm:$0xff]
    %v182 = vld [vmem:[#allocation5 + $0x210] sm:$0xff]
    %v183 = vld [vmem:[#allocation5 + $0x218] sm:$0xff]
    %v184 = vld [vmem:[#allocation5 + $0x220] sm:$0xff]
    %v185 = vld [vmem:[#allocation5 + $0x228] sm:$0xff]
    %v186 = vld [vmem:[#allocation5 + $0x230] sm:$0xff]
    %v187 = vld [vmem:[#allocation5 + $0x238] sm:$0xff]
    %v188 = vld [vmem:[#allocation5 + $0x240] sm:$0xff]
    %v189 = vld [vmem:[#allocation5 + $0x248] sm:$0xff]
    %v190 = vld [vmem:[#allocation5 + $0x250] sm:$0xff]
    %v191 = vld [vmem:[#allocation5 + $0x258] sm:$0xff]
    %v192 = vld [vmem:[#allocation5 + $0x260] sm:$0xff]
    %v193 = vld [vmem:[#allocation5 + $0x268] sm:$0xff]
    %v194 = vld [vmem:[#allocation5 + $0x270] sm:$0xff]
    %v195 = vld [vmem:[#allocation5 + $0x278] sm:$0xff]
    %v196 = vld [vmem:[#allocation5 + $0x280] sm:$0xff]
    %v197 = vld [vmem:[#allocation5 + $0x288] sm:$0xff]
    %v198 = vld [vmem:[#allocation5 + $0x290] sm:$0xff]
    %v199 = vld [vmem:[#allocation5 + $0x298] sm:$0xff]
    %v200 = vld [vmem:[#allocation5 + $0x2a0] sm:$0xff]
    %v201 = vld [vmem:[#allocation5 + $0x2a8] sm:$0xff]
    %v202 = vld [vmem:[#allocation5 + $0x2b0] sm:$0xff]
    %v203 = vld [vmem:[#allocation5 + $0x2b8] sm:$0xff]
    %v204 = vld [vmem:[#allocation5 + $0x2c0] sm:$0xff]
    %v205 = vld [vmem:[#allocation5 + $0x2c8] sm:$0xff]
    %v206 = vld [vmem:[#allocation5 + $0x2d0] sm:$0xff]
    %v207 = vld [vmem:[#allocation5 + $0x2d8] sm:$0xff]
    %v208 = vld [vmem:[#allocation5 + $0x2e0] sm:$0xff]
    %v209 = vld [vmem:[#allocation5 + $0x2e8] sm:$0xff]
    %v210 = vld [vmem:[#allocation5 + $0x2f0] sm:$0xff]
    %v211 = vld [vmem:[#allocation5 + $0x2f8] sm:$0xff]
    %v212 = vld [vmem:[#allocation5 + $0x300] sm:$0xff]
    %v213 = vld [vmem:[#allocation5 + $0x308] sm:$0xff]
    %v214 = vld [vmem:[#allocation5 + $0x310] sm:$0xff]
    %v215 = vld [vmem:[#allocation5 + $0x318] sm:$0xff]
    %v216 = vld [vmem:[#allocation5 + $0x320] sm:$0xff]
    %v217 = vld [vmem:[#allocation5 + $0x328] sm:$0xff]
    %v218 = vld [vmem:[#allocation5 + $0x330] sm:$0xff]
    %v219 = vld [vmem:[#allocation5 + $0x338] sm:$0xff]
    %v220 = vld [vmem:[#allocation5 + $0x340] sm:$0xff]
    %v221 = vld [vmem:[#allocation5 + $0x348] sm:$0xff]
    %v222 = vld [vmem:[#allocation5 + $0x350] sm:$0xff]
    %v223 = vld [vmem:[#allocation5 + $0x358] sm:$0xff]
    %v224 = vld [vmem:[#allocation5 + $0x360] sm:$0xff]
    %v225 = vld [vmem:[#allocation5 + $0x368] sm:$0xff]
    %v226 = vld [vmem:[#allocation5 + $0x370] sm:$0xff]
    %v227 = vld [vmem:[#allocation5 + $0x378] sm:$0xff]
    %v228 = vld [vmem:[#allocation5 + $0x380] sm:$0xff]
    %v229 = vld [vmem:[#allocation5 + $0x388] sm:$0xff]
    %v230 = vld [vmem:[#allocation5 + $0x390] sm:$0xff]
    %v231 = vld [vmem:[#allocation5 + $0x398] sm:$0xff]
    %v232 = vld [vmem:[#allocation5 + $0x3a0] sm:$0xff]
    %v233 = vld [vmem:[#allocation5 + $0x3a8] sm:$0xff]
    %v234 = vld [vmem:[#allocation5 + $0x3b0] sm:$0xff]
    %v235 = vld [vmem:[#allocation5 + $0x3b8] sm:$0xff]
    %v236 = vld [vmem:[#allocation5 + $0x3c0] sm:$0xff]
    %v237 = vld [vmem:[#allocation5 + $0x3c8] sm:$0xff]
    %v238 = vld [vmem:[#allocation5 + $0x3d0] sm:$0xff]
    %v239 = vld [vmem:[#allocation5 + $0x3d8] sm:$0xff]
    %v240 = vld [vmem:[#allocation5 + $0x3e0] sm:$0xff]
    %v241 = vld [vmem:[#allocation5 + $0x3e8] sm:$0xff]
    %v242 = vld [vmem:[#allocation5 + $0x3f0] sm:$0xff]
    %v243 = vld [vmem:[#allocation5 + $0x3f8] sm:$0xff]
    %v244 = vld [vmem:[#allocation5 + $0x400] sm:$0xff]
    %v245 = vld [vmem:[#allocation5 + $0x408] sm:$0xff]
    %v246 = vld [vmem:[#allocation5 + $0x410] sm:$0xff]
    %v247 = vld [vmem:[#allocation5 + $0x418] sm:$0xff]
    %v248 = vld [vmem:[#allocation5 + $0x420] sm:$0xff]
    %v249 = vld [vmem:[#allocation5 + $0x428] sm:$0xff]
    %v250 = vld [vmem:[#allocation5 + $0x430] sm:$0xff]
    %v251 = vld [vmem:[#allocation5 + $0x438] sm:$0xff]
    %v252 = vld [vmem:[#allocation5 + $0x440] sm:$0xff]
    %v253 = vld [vmem:[#allocation5 + $0x448] sm:$0xff]
    %v254 = vld [vmem:[#allocation5 + $0x450] sm:$0xff]
    %v255 = vld [vmem:[#allocation5 + $0x458] sm:$0xff]
    %v256 = vld [vmem:[#allocation5 + $0x460] sm:$0xff]
    %v257 = vld [vmem:[#allocation5 + $0x468] sm:$0xff]
    %v258 = vld [vmem:[#allocation5 + $0x470] sm:$0xff]
    %v259 = vld [vmem:[#allocation5 + $0x478] sm:$0xff]
    %v260 = vld [vmem:[#allocation5 + $0x480] sm:$0xff]
    %v261 = vld [vmem:[#allocation5 + $0x488] sm:$0xff]
    %v262 = vld [vmem:[#allocation5 + $0x490] sm:$0xff]
    %v263 = vld [vmem:[#allocation5 + $0x498] sm:$0xff]
    %v264 = vld [vmem:[#allocation5 + $0x4a0] sm:$0xff]
    %v265 = vld [vmem:[#allocation5 + $0x4a8] sm:$0xff]
    %v266 = vld [vmem:[#allocation5 + $0x4b0] sm:$0xff]
    %v267 = vld [vmem:[#allocation5 + $0x4b8] sm:$0xff]
    %v268 = vld [vmem:[#allocation5 + $0x4c0] sm:$0xff]
    %v269 = vld [vmem:[#allocation5 + $0x4c8] sm:$0xff]
    %v270 = vld [vmem:[#allocation5 + $0x4d0] sm:$0xff]
    %v271 = vld [vmem:[#allocation5 + $0x4d8] sm:$0xff]
    %v272 = vld [vmem:[#allocation5 + $0x4e0] sm:$0xff]
    %v273 = vld [vmem:[#allocation5 + $0x4e8] sm:$0xff]
    %v274 = vld [vmem:[#allocation5 + $0x4f0] sm:$0xff]
    %v275 = vld [vmem:[#allocation5 + $0x4f8] sm:$0xff]
    %v276 = vld [vmem:[#allocation5 + $0x500] sm:$0xff]
    %v277 = vld [vmem:[#allocation5 + $0x508] sm:$0xff]
    %v278 = vld [vmem:[#allocation5 + $0x510] sm:$0xff]
    %v279 = vld [vmem:[#allocation5 + $0x518] sm:$0xff]
    %v280 = vld [vmem:[#allocation5 + $0x520] sm:$0xff]
    %v281 = vld [vmem:[#allocation5 + $0x528] sm:$0xff]
    %v282 = vld [vmem:[#allocation5 + $0x530] sm:$0xff]
    %v283 = vld [vmem:[#allocation5 + $0x538] sm:$0xff]
    %v284 = vld [vmem:[#allocation5 + $0x540] sm:$0xff]
    %v285 = vld [vmem:[#allocation5 + $0x548] sm:$0xff]
    %v286 = vld [vmem:[#allocation5 + $0x550] sm:$0xff]
    %v287 = vld [vmem:[#allocation5 + $0x558] sm:$0xff]
    %v288 = vld [vmem:[#allocation5 + $0x560] sm:$0xff]
    %v289 = vld [vmem:[#allocation5 + $0x568] sm:$0xff]
    %v290 = vld [vmem:[#allocation5 + $0x570] sm:$0xff]
    %v291 = vld [vmem:[#allocation5 + $0x578] sm:$0xff]
    %v292 = vld [vmem:[#allocation5 + $0x580] sm:$0xff]
    %v293 = vld [vmem:[#allocation5 + $0x588] sm:$0xff]
    %v294 = vld [vmem:[#allocation5 + $0x590] sm:$0xff]
    %v295 = vld [vmem:[#allocation5 + $0x598] sm:$0xff]
    %v296 = vld [vmem:[#allocation5 + $0x5a0] sm:$0xff]
    %v297 = vld [vmem:[#allocation5 + $0x5a8] sm:$0xff]
    %v298 = vld [vmem:[#allocation5 + $0x5b0] sm:$0xff]
    %v299 = vld [vmem:[#allocation5 + $0x5b8] sm:$0xff]
    %v300 = vld [vmem:[#allocation5 + $0x5c0] sm:$0xff]
    %v301 = vld [vmem:[#allocation5 + $0x5c8] sm:$0xff]
    %v302 = vld [vmem:[#allocation5 + $0x5d0] sm:$0xff]
    %v303 = vld [vmem:[#allocation5 + $0x5d8] sm:$0xff]
    %v304 = vld [vmem:[#allocation5 + $0x5e0] sm:$0xff]
    %v305 = vld [vmem:[#allocation5 + $0x5e8] sm:$0xff]
    %v306 = vld [vmem:[#allocation5 + $0x5f0] sm:$0xff]
    %v307 = vld [vmem:[#allocation5 + $0x5f8] sm:$0xff]
    %v308 = vld [vmem:[#allocation5 + $0x600] sm:$0xff]
    %v309 = vld [vmem:[#allocation5 + $0x608] sm:$0xff]
    %v310 = vld [vmem:[#allocation5 + $0x610] sm:$0xff]
    %v311 = vld [vmem:[#allocation5 + $0x618] sm:$0xff]
    %v312 = vld [vmem:[#allocation5 + $0x620] sm:$0xff]
    %v313 = vld [vmem:[#allocation5 + $0x628] sm:$0xff]
    %v314 = vld [vmem:[#allocation5 + $0x630] sm:$0xff]
    %v315 = vld [vmem:[#allocation5 + $0x638] sm:$0xff]
    %v316 = vld [vmem:[#allocation5 + $0x640] sm:$0xff]
    %v317 = vld [vmem:[#allocation5 + $0x648] sm:$0xff]
    %v318 = vld [vmem:[#allocation5 + $0x650] sm:$0xff]
    %v319 = vld [vmem:[#allocation5 + $0x658] sm:$0xff]
    %v320 = vld [vmem:[#allocation5 + $0x660] sm:$0xff]
    %v321 = vld [vmem:[#allocation5 + $0x668] sm:$0xff]
    %v322 = vld [vmem:[#allocation5 + $0x670] sm:$0xff]
    %v323 = vld [vmem:[#allocation5 + $0x678] sm:$0xff]
    %v324 = vld [vmem:[#allocation5 + $0x680] sm:$0xff]
    %v325 = vld [vmem:[#allocation5 + $0x688] sm:$0xff]
    %v326 = vld [vmem:[#allocation5 + $0x690] sm:$0xff]
    %v327 = vld [vmem:[#allocation5 + $0x698] sm:$0xff]
    %v328 = vld [vmem:[#allocation5 + $0x6a0] sm:$0xff]
    %v329 = vld [vmem:[#allocation5 + $0x6a8] sm:$0xff]
    %v330 = vld [vmem:[#allocation5 + $0x6b0] sm:$0xff]
    %v331 = vld [vmem:[#allocation5 + $0x6b8] sm:$0xff]
    %v332 = vld [vmem:[#allocation5 + $0x6c0] sm:$0xff]
    %v333 = vld [vmem:[#allocation5 + $0x6c8] sm:$0xff]
    %v334 = vld [vmem:[#allocation5 + $0x6d0] sm:$0xff]
    %v335 = vld [vmem:[#allocation5 + $0x6d8] sm:$0xff]
    %v336 = vld [vmem:[#allocation5 + $0x6e0] sm:$0xff]
    %v337 = vld [vmem:[#allocation5 + $0x6e8] sm:$0xff]
    %v338 = vld [vmem:[#allocation5 + $0x6f0] sm:$0xff]
    %v339 = vld [vmem:[#allocation5 + $0x6f8] sm:$0xff]
    %v340 = vld [vmem:[#allocation7] sm:$0xf]
    %v342 = vlaneseq
    %v343 = vshrl.u32 %v342, 7
    %v344 = vsub.s32 0, %v343
    %v345 = vrot.slane %v340, %v344
    %v346 = vlaneseq
    %v347 = vshrl.u32 %v346, 7
    %v348 = vsub.s32 1, %v347
    %v349 = vrot.slane %v340, %v348
    %v350 = vlaneseq
    %v351 = vshrl.u32 %v350, 7
    %v352 = vsub.s32 2, %v351
    %v353 = vrot.slane %v340, %v352
    %v354 = vlaneseq
    %v355 = vshrl.u32 %v354, 7
    %v356 = vsub.s32 3, %v355
    %v357 = vrot.slane %v340, %v356
    %v366 = vunpack.c.l.b16 %v112
    %v367 = vunpack.c.h.b16 %v112
    %v368 = vunpack.c.l.b16 %v113
    %v369 = vunpack.c.h.b16 %v113
    %v370 = vunpack.c.l.b16 %v114
    %v371 = vunpack.c.h.b16 %v114
    %v372 = vunpack.c.l.b16 %v115
    %v373 = vpack.c.b16 %v366, %v366
    %v374 = vpack.c.b16 %v367, %v367
    %v375 = vpack.c.b16 %v368, %v368
    %v376 = vpack.c.b16 %v369, %v369
    %v377 = vpack.c.b16 %v370, %v370
    %v378 = vpack.c.b16 %v371, %v371
    %v379 = vpack.c.b16 %v372, %v372
    %v611 = vunpack.c.l.b16 %v116
    %v612 = vunpack.c.h.b16 %v116
    %v613 = vunpack.c.l.b16 %v117
    %v614 = vunpack.c.h.b16 %v117
    %v615 = vunpack.c.l.b16 %v118
    %v616 = vunpack.c.h.b16 %v118
    %v617 = vunpack.c.l.b16 %v119
    %v618 = vunpack.c.h.b16 %v119
    %v619 = vunpack.c.l.b16 %v120
    %v620 = vunpack.c.h.b16 %v120
    %v621 = vunpack.c.l.b16 %v121
    %v622 = vunpack.c.h.b16 %v121
    %v623 = vunpack.c.l.b16 %v122
    %v624 = vunpack.c.h.b16 %v122
    %v625 = vunpack.c.l.b16 %v123
    %v626 = vunpack.c.h.b16 %v123
    %v627 = vunpack.c.l.b16 %v124
    %v628 = vunpack.c.h.b16 %v124
    %v629 = vunpack.c.l.b16 %v125
    %v630 = vunpack.c.h.b16 %v125
    %v631 = vunpack.c.l.b16 %v126
    %v632 = vunpack.c.h.b16 %v126
    %v633 = vunpack.c.l.b16 %v127
    %v634 = vunpack.c.h.b16 %v127
    %v635 = vunpack.c.l.b16 %v128
    %v636 = vunpack.c.h.b16 %v128
    %v637 = vunpack.c.l.b16 %v129
    %v638 = vunpack.c.h.b16 %v129
    %v639 = vunpack.c.l.b16 %v130
    %v640 = vunpack.c.h.b16 %v130
    %v641 = vunpack.c.l.b16 %v131
    %v642 = vunpack.c.h.b16 %v131
    %v643 = vunpack.c.l.b16 %v132
    %v644 = vunpack.c.h.b16 %v132
    %v645 = vunpack.c.l.b16 %v133
    %v646 = vunpack.c.h.b16 %v133
    %v647 = vunpack.c.l.b16 %v134
    %v648 = vunpack.c.h.b16 %v134
    %v649 = vunpack.c.l.b16 %v135
    %v650 = vunpack.c.h.b16 %v135
    %v651 = vunpack.c.l.b16 %v136
    %v652 = vunpack.c.h.b16 %v136
    %v653 = vunpack.c.l.b16 %v137
    %v654 = vunpack.c.h.b16 %v137
    %v655 = vunpack.c.l.b16 %v138
    %v656 = vunpack.c.h.b16 %v138
    %v657 = vunpack.c.l.b16 %v139
    %v658 = vunpack.c.h.b16 %v139
    %v659 = vunpack.c.l.b16 %v140
    %v660 = vunpack.c.h.b16 %v140
    %v661 = vunpack.c.l.b16 %v141
    %v662 = vunpack.c.h.b16 %v141
    %v663 = vunpack.c.l.b16 %v142
    %v664 = vunpack.c.h.b16 %v142
    %v665 = vunpack.c.l.b16 %v143
    %v666 = vunpack.c.h.b16 %v143
    %v667 = vunpack.c.l.b16 %v144
    %v668 = vunpack.c.h.b16 %v144
    %v669 = vunpack.c.l.b16 %v145
    %v670 = vunpack.c.h.b16 %v145
    %v671 = vunpack.c.l.b16 %v146
    %v672 = vunpack.c.h.b16 %v146
    %v673 = vunpack.c.l.b16 %v147
    %v674 = vunpack.c.h.b16 %v147
    %v675 = vunpack.c.l.b16 %v148
    %v676 = vunpack.c.h.b16 %v148
    %v677 = vunpack.c.l.b16 %v149
    %v678 = vunpack.c.h.b16 %v149
    %v679 = vunpack.c.l.b16 %v150
    %v680 = vunpack.c.h.b16 %v150
    %v681 = vunpack.c.l.b16 %v151
    %v682 = vunpack.c.h.b16 %v151
    %v683 = vunpack.c.l.b16 %v152
    %v684 = vunpack.c.h.b16 %v152
    %v685 = vunpack.c.l.b16 %v153
    %v686 = vunpack.c.h.b16 %v153
    %v687 = vunpack.c.l.b16 %v154
    %v688 = vunpack.c.h.b16 %v154
    %v689 = vunpack.c.l.b16 %v155
    %v690 = vunpack.c.h.b16 %v155
    %v691 = vunpack.c.l.b16 %v156
    %v692 = vunpack.c.h.b16 %v156
    %v693 = vunpack.c.l.b16 %v157
    %v694 = vunpack.c.h.b16 %v157
    %v695 = vunpack.c.l.b16 %v158
    %v696 = vunpack.c.h.b16 %v158
    %v697 = vunpack.c.l.b16 %v159
    %v698 = vunpack.c.h.b16 %v159
    %v699 = vunpack.c.l.b16 %v160
    %v700 = vunpack.c.h.b16 %v160
    %v701 = vunpack.c.l.b16 %v161
    %v702 = vunpack.c.h.b16 %v161
    %v703 = vunpack.c.l.b16 %v162
    %v704 = vunpack.c.h.b16 %v162
    %v705 = vunpack.c.l.b16 %v163
    %v706 = vunpack.c.h.b16 %v163
    %v707 = vunpack.c.l.b16 %v164
    %v708 = vunpack.c.h.b16 %v164
    %v709 = vunpack.c.l.b16 %v165
    %v710 = vunpack.c.h.b16 %v165
    %v711 = vunpack.c.l.b16 %v166
    %v712 = vunpack.c.h.b16 %v166
    %v713 = vunpack.c.l.b16 %v167
    %v714 = vunpack.c.h.b16 %v167
    %v715 = vunpack.c.l.b16 %v168
    %v716 = vunpack.c.h.b16 %v168
    %v717 = vunpack.c.l.b16 %v169
    %v718 = vunpack.c.h.b16 %v169
    %v719 = vunpack.c.l.b16 %v170
    %v720 = vunpack.c.h.b16 %v170
    %v721 = vunpack.c.l.b16 %v171
    %v722 = vunpack.c.h.b16 %v171
    %v723 = vunpack.c.l.b16 %v172
    %v724 = vunpack.c.h.b16 %v172
    %v725 = vunpack.c.l.b16 %v173
    %v726 = vunpack.c.h.b16 %v173
    %v727 = vunpack.c.l.b16 %v174
    %v728 = vunpack.c.h.b16 %v174
    %v729 = vunpack.c.l.b16 %v175
    %v730 = vunpack.c.h.b16 %v175
    %v731 = vunpack.c.l.b16 %v176
    %v732 = vunpack.c.h.b16 %v176
    %v733 = vunpack.c.l.b16 %v177
    %v734 = vunpack.c.h.b16 %v177
    %v735 = vunpack.c.l.b16 %v178
    %v736 = vunpack.c.h.b16 %v178
    %v737 = vunpack.c.l.b16 %v179
    %v738 = vunpack.c.h.b16 %v179
    %v739 = vunpack.c.l.b16 %v180
    %v740 = vunpack.c.h.b16 %v180
    %v741 = vunpack.c.l.b16 %v181
    %v742 = vunpack.c.h.b16 %v181
    %v743 = vunpack.c.l.b16 %v182
    %v744 = vunpack.c.h.b16 %v182
    %v745 = vunpack.c.l.b16 %v183
    %v746 = vunpack.c.h.b16 %v183
    %v747 = vunpack.c.l.b16 %v184
    %v748 = vunpack.c.h.b16 %v184
    %v749 = vunpack.c.l.b16 %v185
    %v750 = vunpack.c.h.b16 %v185
    %v751 = vunpack.c.l.b16 %v186
    %v752 = vunpack.c.h.b16 %v186
    %v753 = vunpack.c.l.b16 %v187
    %v754 = vunpack.c.h.b16 %v187
    %v755 = vunpack.c.l.b16 %v188
    %v756 = vunpack.c.h.b16 %v188
    %v757 = vunpack.c.l.b16 %v189
    %v758 = vunpack.c.h.b16 %v189
    %v759 = vunpack.c.l.b16 %v190
    %v760 = vunpack.c.h.b16 %v190
    %v761 = vunpack.c.l.b16 %v191
    %v762 = vunpack.c.h.b16 %v191
    %v763 = vunpack.c.l.b16 %v192
    %v764 = vunpack.c.h.b16 %v192
    %v765 = vunpack.c.l.b16 %v193
    %v766 = vunpack.c.h.b16 %v193
    %v767 = vunpack.c.l.b16 %v194
    %v768 = vunpack.c.h.b16 %v194
    %v769 = vunpack.c.l.b16 %v195
    %v770 = vunpack.c.h.b16 %v195
    %v771 = vunpack.c.l.b16 %v196
    %v772 = vunpack.c.h.b16 %v196
    %v773 = vunpack.c.l.b16 %v197
    %v774 = vunpack.c.h.b16 %v197
    %v775 = vunpack.c.l.b16 %v198
    %v776 = vunpack.c.h.b16 %v198
    %v777 = vunpack.c.l.b16 %v199
    %v778 = vunpack.c.h.b16 %v199
    %v779 = vunpack.c.l.b16 %v200
    %v780 = vunpack.c.h.b16 %v200
    %v781 = vunpack.c.l.b16 %v201
    %v782 = vunpack.c.h.b16 %v201
    %v783 = vunpack.c.l.b16 %v202
    %v784 = vunpack.c.h.b16 %v202
    %v785 = vunpack.c.l.b16 %v203
    %v786 = vunpack.c.h.b16 %v203
    %v787 = vunpack.c.l.b16 %v204
    %v788 = vunpack.c.h.b16 %v204
    %v789 = vunpack.c.l.b16 %v205
    %v790 = vunpack.c.h.b16 %v205
    %v791 = vunpack.c.l.b16 %v206
    %v792 = vunpack.c.h.b16 %v206
    %v793 = vunpack.c.l.b16 %v207
    %v794 = vunpack.c.h.b16 %v207
    %v795 = vunpack.c.l.b16 %v208
    %v796 = vunpack.c.h.b16 %v208
    %v797 = vunpack.c.l.b16 %v209
    %v798 = vunpack.c.h.b16 %v209
    %v799 = vunpack.c.l.b16 %v210
    %v800 = vunpack.c.h.b16 %v210
    %v801 = vunpack.c.l.b16 %v211
    %v802 = vunpack.c.h.b16 %v211
    %v803 = vunpack.c.l.b16 %v212
    %v804 = vunpack.c.h.b16 %v212
    %v805 = vunpack.c.l.b16 %v213
    %v806 = vunpack.c.h.b16 %v213
    %v807 = vunpack.c.l.b16 %v214
    %v808 = vunpack.c.h.b16 %v214
    %v809 = vunpack.c.l.b16 %v215
    %v810 = vunpack.c.h.b16 %v215
    %v811 = vunpack.c.l.b16 %v216
    %v812 = vunpack.c.h.b16 %v216
    %v813 = vunpack.c.l.b16 %v217
    %v814 = vunpack.c.h.b16 %v217
    %v815 = vunpack.c.l.b16 %v218
    %v816 = vunpack.c.h.b16 %v218
    %v817 = vunpack.c.l.b16 %v219
    %v818 = vunpack.c.h.b16 %v219
    %v819 = vunpack.c.l.b16 %v220
    %v820 = vunpack.c.h.b16 %v220
    %v821 = vunpack.c.l.b16 %v221
    %v822 = vunpack.c.h.b16 %v221
    %v823 = vunpack.c.l.b16 %v222
    %v824 = vunpack.c.h.b16 %v222
    %v825 = vunpack.c.l.b16 %v223
    %v826 = vunpack.c.h.b16 %v223
    %v827 = vunpack.c.l.b16 %v224
    %v828 = vunpack.c.h.b16 %v224
    %v829 = vunpack.c.l.b16 %v225
    %v830 = vunpack.c.h.b16 %v225
    %v831 = vunpack.c.l.b16 %v226
    %v832 = vunpack.c.h.b16 %v226
    %v833 = vunpack.c.l.b16 %v227
    %v834 = vunpack.c.h.b16 %v227
    %v835 = vunpack.c.l.b16 %v228
    %v836 = vunpack.c.h.b16 %v228
    %v837 = vunpack.c.l.b16 %v229
    %v838 = vunpack.c.h.b16 %v229
    %v839 = vunpack.c.l.b16 %v230
    %v840 = vunpack.c.h.b16 %v230
    %v841 = vunpack.c.l.b16 %v231
    %v842 = vunpack.c.h.b16 %v231
    %v843 = vunpack.c.l.b16 %v232
    %v844 = vunpack.c.h.b16 %v232
    %v845 = vunpack.c.l.b16 %v233
    %v846 = vunpack.c.h.b16 %v233
    %v847 = vunpack.c.l.b16 %v234
    %v848 = vunpack.c.h.b16 %v234
    %v849 = vunpack.c.l.b16 %v235
    %v850 = vunpack.c.h.b16 %v235
    %v851 = vunpack.c.l.b16 %v236
    %v852 = vunpack.c.h.b16 %v236
    %v853 = vunpack.c.l.b16 %v237
    %v854 = vunpack.c.h.b16 %v237
    %v855 = vunpack.c.l.b16 %v238
    %v856 = vunpack.c.h.b16 %v238
    %v857 = vunpack.c.l.b16 %v239
    %v858 = vunpack.c.h.b16 %v239
    %v859 = vunpack.c.l.b16 %v240
    %v860 = vunpack.c.h.b16 %v240
    %v861 = vunpack.c.l.b16 %v241
    %v862 = vunpack.c.h.b16 %v241
    %v863 = vunpack.c.l.b16 %v242
    %v864 = vunpack.c.h.b16 %v242
    %v865 = vunpack.c.l.b16 %v243
    %v866 = vunpack.c.h.b16 %v243
    %v867 = vunpack.c.l.b16 %v244
    %v868 = vunpack.c.h.b16 %v244
    %v869 = vunpack.c.l.b16 %v245
    %v870 = vunpack.c.h.b16 %v245
    %v871 = vunpack.c.l.b16 %v246
    %v872 = vunpack.c.h.b16 %v246
    %v873 = vunpack.c.l.b16 %v247
    %v874 = vunpack.c.h.b16 %v247
    %v875 = vunpack.c.l.b16 %v248
    %v876 = vunpack.c.h.b16 %v248
    %v877 = vunpack.c.l.b16 %v249
    %v878 = vunpack.c.h.b16 %v249
    %v879 = vunpack.c.l.b16 %v250
    %v880 = vunpack.c.h.b16 %v250
    %v881 = vunpack.c.l.b16 %v251
    %v882 = vunpack.c.h.b16 %v251
    %v883 = vunpack.c.l.b16 %v252
    %v884 = vunpack.c.h.b16 %v252
    %v885 = vunpack.c.l.b16 %v253
    %v886 = vunpack.c.h.b16 %v253
    %v887 = vunpack.c.l.b16 %v254
    %v888 = vunpack.c.h.b16 %v254
    %v889 = vunpack.c.l.b16 %v255
    %v890 = vunpack.c.h.b16 %v255
    %v891 = vunpack.c.l.b16 %v256
    %v892 = vunpack.c.h.b16 %v256
    %v893 = vunpack.c.l.b16 %v257
    %v894 = vunpack.c.h.b16 %v257
    %v895 = vunpack.c.l.b16 %v258
    %v896 = vunpack.c.h.b16 %v258
    %v897 = vunpack.c.l.b16 %v259
    %v898 = vunpack.c.h.b16 %v259
    %v899 = vunpack.c.l.b16 %v260
    %v900 = vunpack.c.h.b16 %v260
    %v901 = vunpack.c.l.b16 %v261
    %v902 = vunpack.c.h.b16 %v261
    %v903 = vunpack.c.l.b16 %v262
    %v904 = vunpack.c.h.b16 %v262
    %v905 = vunpack.c.l.b16 %v263
    %v906 = vunpack.c.h.b16 %v263
    %v907 = vunpack.c.l.b16 %v264
    %v908 = vunpack.c.h.b16 %v264
    %v909 = vunpack.c.l.b16 %v265
    %v910 = vunpack.c.h.b16 %v265
    %v911 = vunpack.c.l.b16 %v266
    %v912 = vunpack.c.h.b16 %v266
    %v913 = vunpack.c.l.b16 %v267
    %v914 = vunpack.c.h.b16 %v267
    %v915 = vunpack.c.l.b16 %v268
    %v916 = vunpack.c.h.b16 %v268
    %v917 = vunpack.c.l.b16 %v269
    %v918 = vunpack.c.h.b16 %v269
    %v919 = vunpack.c.l.b16 %v270
    %v920 = vunpack.c.h.b16 %v270
    %v921 = vunpack.c.l.b16 %v271
    %v922 = vunpack.c.h.b16 %v271
    %v923 = vunpack.c.l.b16 %v272
    %v924 = vunpack.c.h.b16 %v272
    %v925 = vunpack.c.l.b16 %v273
    %v926 = vunpack.c.h.b16 %v273
    %v927 = vunpack.c.l.b16 %v274
    %v928 = vunpack.c.h.b16 %v274
    %v929 = vunpack.c.l.b16 %v275
    %v930 = vunpack.c.h.b16 %v275
    %v931 = vunpack.c.l.b16 %v276
    %v932 = vunpack.c.h.b16 %v276
    %v933 = vunpack.c.l.b16 %v277
    %v934 = vunpack.c.h.b16 %v277
    %v935 = vunpack.c.l.b16 %v278
    %v936 = vunpack.c.h.b16 %v278
    %v937 = vunpack.c.l.b16 %v279
    %v938 = vunpack.c.h.b16 %v279
    %v939 = vunpack.c.l.b16 %v280
    %v940 = vunpack.c.h.b16 %v280
    %v941 = vunpack.c.l.b16 %v281
    %v942 = vunpack.c.h.b16 %v281
    %v943 = vunpack.c.l.b16 %v282
    %v944 = vunpack.c.h.b16 %v282
    %v945 = vunpack.c.l.b16 %v283
    %v946 = vunpack.c.h.b16 %v283
    %v947 = vunpack.c.l.b16 %v284
    %v948 = vunpack.c.h.b16 %v284
    %v949 = vunpack.c.l.b16 %v285
    %v950 = vunpack.c.h.b16 %v285
    %v951 = vunpack.c.l.b16 %v286
    %v952 = vunpack.c.h.b16 %v286
    %v953 = vunpack.c.l.b16 %v287
    %v954 = vunpack.c.h.b16 %v287
    %v955 = vunpack.c.l.b16 %v288
    %v956 = vunpack.c.h.b16 %v288
    %v957 = vunpack.c.l.b16 %v289
    %v958 = vunpack.c.h.b16 %v289
    %v959 = vunpack.c.l.b16 %v290
    %v960 = vunpack.c.h.b16 %v290
    %v961 = vunpack.c.l.b16 %v291
    %v962 = vunpack.c.h.b16 %v291
    %v963 = vunpack.c.l.b16 %v292
    %v964 = vunpack.c.h.b16 %v292
    %v965 = vunpack.c.l.b16 %v293
    %v966 = vunpack.c.h.b16 %v293
    %v967 = vunpack.c.l.b16 %v294
    %v968 = vunpack.c.h.b16 %v294
    %v969 = vunpack.c.l.b16 %v295
    %v970 = vunpack.c.h.b16 %v295
    %v971 = vunpack.c.l.b16 %v296
    %v972 = vunpack.c.h.b16 %v296
    %v973 = vunpack.c.l.b16 %v297
    %v974 = vunpack.c.h.b16 %v297
    %v975 = vunpack.c.l.b16 %v298
    %v976 = vunpack.c.h.b16 %v298
    %v977 = vunpack.c.l.b16 %v299
    %v978 = vunpack.c.h.b16 %v299
    %v979 = vunpack.c.l.b16 %v300
    %v980 = vunpack.c.h.b16 %v300
    %v981 = vunpack.c.l.b16 %v301
    %v982 = vunpack.c.h.b16 %v301
    %v983 = vunpack.c.l.b16 %v302
    %v984 = vunpack.c.h.b16 %v302
    %v985 = vunpack.c.l.b16 %v303
    %v986 = vunpack.c.h.b16 %v303
    %v987 = vunpack.c.l.b16 %v304
    %v988 = vunpack.c.h.b16 %v304
    %v989 = vunpack.c.l.b16 %v305
    %v990 = vunpack.c.h.b16 %v305
    %v991 = vunpack.c.l.b16 %v306
    %v992 = vunpack.c.h.b16 %v306
    %v993 = vunpack.c.l.b16 %v307
    %v994 = vunpack.c.h.b16 %v307
    %v995 = vunpack.c.l.b16 %v308
    %v996 = vunpack.c.h.b16 %v308
    %v997 = vunpack.c.l.b16 %v309
    %v998 = vunpack.c.h.b16 %v309
    %v999 = vunpack.c.l.b16 %v310
    %v1000 = vunpack.c.h.b16 %v310
    %v1001 = vunpack.c.l.b16 %v311
    %v1002 = vunpack.c.h.b16 %v311
    %v1003 = vunpack.c.l.b16 %v312
    %v1004 = vunpack.c.h.b16 %v312
    %v1005 = vunpack.c.l.b16 %v313
    %v1006 = vunpack.c.h.b16 %v313
    %v1007 = vunpack.c.l.b16 %v314
    %v1008 = vunpack.c.h.b16 %v314
    %v1009 = vunpack.c.l.b16 %v315
    %v1010 = vunpack.c.h.b16 %v315
    %v1011 = vunpack.c.l.b16 %v316
    %v1012 = vunpack.c.h.b16 %v316
    %v1013 = vunpack.c.l.b16 %v317
    %v1014 = vunpack.c.h.b16 %v317
    %v1015 = vunpack.c.l.b16 %v318
    %v1016 = vunpack.c.h.b16 %v318
    %v1017 = vunpack.c.l.b16 %v319
    %v1018 = vunpack.c.h.b16 %v319
    %v1019 = vunpack.c.l.b16 %v320
    %v1020 = vunpack.c.h.b16 %v320
    %v1021 = vunpack.c.l.b16 %v321
    %v1022 = vunpack.c.h.b16 %v321
    %v1023 = vunpack.c.l.b16 %v322
    %v1024 = vunpack.c.h.b16 %v322
    %v1025 = vunpack.c.l.b16 %v323
    %v1026 = vunpack.c.h.b16 %v323
    %v1027 = vunpack.c.l.b16 %v324
    %v1028 = vunpack.c.h.b16 %v324
    %v1029 = vunpack.c.l.b16 %v325
    %v1030 = vunpack.c.h.b16 %v325
    %v1031 = vunpack.c.l.b16 %v326
    %v1032 = vunpack.c.h.b16 %v326
    %v1033 = vunpack.c.l.b16 %v327
    %v1034 = vunpack.c.h.b16 %v327
    %v1035 = vunpack.c.l.b16 %v328
    %v1036 = vunpack.c.h.b16 %v328
    %v1037 = vunpack.c.l.b16 %v329
    %v1038 = vunpack.c.h.b16 %v329
    %v1039 = vunpack.c.l.b16 %v330
    %v1040 = vunpack.c.h.b16 %v330
    %v1041 = vunpack.c.l.b16 %v331
    %v1042 = vunpack.c.h.b16 %v331
    %v1043 = vunpack.c.l.b16 %v332
    %v1044 = vunpack.c.h.b16 %v332
    %v1045 = vunpack.c.l.b16 %v333
    %v1046 = vunpack.c.h.b16 %v333
    %v1047 = vunpack.c.l.b16 %v334
    %v1048 = vunpack.c.h.b16 %v334
    %v1049 = vunpack.c.l.b16 %v335
    %v1050 = vunpack.c.h.b16 %v335
    %v1051 = vunpack.c.l.b16 %v336
    %v1052 = vunpack.c.h.b16 %v336
    %v1053 = vunpack.c.l.b16 %v337
    %v1054 = vunpack.c.h.b16 %v337
    %v1055 = vunpack.c.l.b16 %v338
    %v1056 = vunpack.c.h.b16 %v338
    %v1057 = vunpack.c.l.b16 %v339
    %v1058 = vunpack.c.h.b16 %v339
    %v1059 = vpack.c.b16 %v615, %v611
    %v1060 = vpack.c.b16 %v616, %v612
    %v1061 = vpack.c.b16 %v617, %v613
    %v1062 = vpack.c.b16 %v618, %v614
    %v1063 = vpack.c.b16 %v623, %v619
    %v1064 = vpack.c.b16 %v624, %v620
    %v1065 = vpack.c.b16 %v625, %v621
    %v1066 = vpack.c.b16 %v626, %v622
    %v1067 = vpack.c.b16 %v631, %v627
    %v1068 = vpack.c.b16 %v632, %v628
    %v1069 = vpack.c.b16 %v633, %v629
    %v1070 = vpack.c.b16 %v634, %v630
    %v1071 = vpack.c.b16 %v639, %v635
    %v1072 = vpack.c.b16 %v640, %v636
    %v1073 = vpack.c.b16 %v641, %v637
    %v1074 = vpack.c.b16 %v642, %v638
    %v1075 = vpack.c.b16 %v647, %v643
    %v1076 = vpack.c.b16 %v648, %v644
    %v1077 = vpack.c.b16 %v649, %v645
    %v1078 = vpack.c.b16 %v650, %v646
    %v1079 = vpack.c.b16 %v655, %v651
    %v1080 = vpack.c.b16 %v656, %v652
    %v1081 = vpack.c.b16 %v657, %v653
    %v1082 = vpack.c.b16 %v658, %v654
    %v1083 = vpack.c.b16 %v663, %v659
    %v1084 = vpack.c.b16 %v664, %v660
    %v1085 = vpack.c.b16 %v665, %v661
    %v1086 = vpack.c.b16 %v666, %v662
    %v1087 = vpack.c.b16 %v671, %v667
    %v1088 = vpack.c.b16 %v672, %v668
    %v1089 = vpack.c.b16 %v673, %v669
    %v1090 = vpack.c.b16 %v674, %v670
    %v1091 = vpack.c.b16 %v679, %v675
    %v1092 = vpack.c.b16 %v680, %v676
    %v1093 = vpack.c.b16 %v681, %v677
    %v1094 = vpack.c.b16 %v682, %v678
    %v1095 = vpack.c.b16 %v687, %v683
    %v1096 = vpack.c.b16 %v688, %v684
    %v1097 = vpack.c.b16 %v689, %v685
    %v1098 = vpack.c.b16 %v690, %v686
    %v1099 = vpack.c.b16 %v695, %v691
    %v1100 = vpack.c.b16 %v696, %v692
    %v1101 = vpack.c.b16 %v697, %v693
    %v1102 = vpack.c.b16 %v698, %v694
    %v1103 = vpack.c.b16 %v703, %v699
    %v1104 = vpack.c.b16 %v704, %v700
    %v1105 = vpack.c.b16 %v705, %v701
    %v1106 = vpack.c.b16 %v706, %v702
    %v1107 = vpack.c.b16 %v711, %v707
    %v1108 = vpack.c.b16 %v712, %v708
    %v1109 = vpack.c.b16 %v713, %v709
    %v1110 = vpack.c.b16 %v714, %v710
    %v1111 = vpack.c.b16 %v719, %v715
    %v1112 = vpack.c.b16 %v720, %v716
    %v1113 = vpack.c.b16 %v721, %v717
    %v1114 = vpack.c.b16 %v722, %v718
    %v1115 = vpack.c.b16 %v727, %v723
    %v1116 = vpack.c.b16 %v728, %v724
    %v1117 = vpack.c.b16 %v729, %v725
    %v1118 = vpack.c.b16 %v730, %v726
    %v1119 = vpack.c.b16 %v735, %v731
    %v1120 = vpack.c.b16 %v736, %v732
    %v1121 = vpack.c.b16 %v737, %v733
    %v1122 = vpack.c.b16 %v738, %v734
    %v1123 = vpack.c.b16 %v743, %v739
    %v1124 = vpack.c.b16 %v744, %v740
    %v1125 = vpack.c.b16 %v745, %v741
    %v1126 = vpack.c.b16 %v746, %v742
    %v1127 = vpack.c.b16 %v751, %v747
    %v1128 = vpack.c.b16 %v752, %v748
    %v1129 = vpack.c.b16 %v753, %v749
    %v1130 = vpack.c.b16 %v754, %v750
    %v1131 = vpack.c.b16 %v759, %v755
    %v1132 = vpack.c.b16 %v760, %v756
    %v1133 = vpack.c.b16 %v761, %v757
    %v1134 = vpack.c.b16 %v762, %v758
    %v1135 = vpack.c.b16 %v767, %v763
    %v1136 = vpack.c.b16 %v768, %v764
    %v1137 = vpack.c.b16 %v769, %v765
    %v1138 = vpack.c.b16 %v770, %v766
    %v1139 = vpack.c.b16 %v775, %v771
    %v1140 = vpack.c.b16 %v776, %v772
    %v1141 = vpack.c.b16 %v777, %v773
    %v1142 = vpack.c.b16 %v778, %v774
    %v1143 = vpack.c.b16 %v783, %v779
    %v1144 = vpack.c.b16 %v784, %v780
    %v1145 = vpack.c.b16 %v785, %v781
    %v1146 = vpack.c.b16 %v786, %v782
    %v1147 = vpack.c.b16 %v791, %v787
    %v1148 = vpack.c.b16 %v792, %v788
    %v1149 = vpack.c.b16 %v793, %v789
    %v1150 = vpack.c.b16 %v794, %v790
    %v1151 = vpack.c.b16 %v799, %v795
    %v1152 = vpack.c.b16 %v800, %v796
    %v1153 = vpack.c.b16 %v801, %v797
    %v1154 = vpack.c.b16 %v802, %v798
    %v1155 = vpack.c.b16 %v807, %v803
    %v1156 = vpack.c.b16 %v808, %v804
    %v1157 = vpack.c.b16 %v809, %v805
    %v1158 = vpack.c.b16 %v810, %v806
    %v1159 = vpack.c.b16 %v815, %v811
    %v1160 = vpack.c.b16 %v816, %v812
    %v1161 = vpack.c.b16 %v817, %v813
    %v1162 = vpack.c.b16 %v818, %v814
    %v1163 = vpack.c.b16 %v823, %v819
    %v1164 = vpack.c.b16 %v824, %v820
    %v1165 = vpack.c.b16 %v825, %v821
    %v1166 = vpack.c.b16 %v826, %v822
    %v1167 = vpack.c.b16 %v831, %v827
    %v1168 = vpack.c.b16 %v832, %v828
    %v1169 = vpack.c.b16 %v833, %v829
    %v1170 = vpack.c.b16 %v834, %v830
    %v1171 = vpack.c.b16 %v839, %v835
    %v1172 = vpack.c.b16 %v840, %v836
    %v1173 = vpack.c.b16 %v841, %v837
    %v1174 = vpack.c.b16 %v842, %v838
    %v1175 = vpack.c.b16 %v847, %v843
    %v1176 = vpack.c.b16 %v848, %v844
    %v1177 = vpack.c.b16 %v849, %v845
    %v1178 = vpack.c.b16 %v850, %v846
    %v1179 = vpack.c.b16 %v855, %v851
    %v1180 = vpack.c.b16 %v856, %v852
    %v1181 = vpack.c.b16 %v857, %v853
    %v1182 = vpack.c.b16 %v858, %v854
    %v1183 = vpack.c.b16 %v863, %v859
    %v1184 = vpack.c.b16 %v864, %v860
    %v1185 = vpack.c.b16 %v865, %v861
    %v1186 = vpack.c.b16 %v866, %v862
    %v1187 = vpack.c.b16 %v871, %v867
    %v1188 = vpack.c.b16 %v872, %v868
    %v1189 = vpack.c.b16 %v873, %v869
    %v1190 = vpack.c.b16 %v874, %v870
    %v1191 = vpack.c.b16 %v879, %v875
    %v1192 = vpack.c.b16 %v880, %v876
    %v1193 = vpack.c.b16 %v881, %v877
    %v1194 = vpack.c.b16 %v882, %v878
    %v1195 = vpack.c.b16 %v887, %v883
    %v1196 = vpack.c.b16 %v888, %v884
    %v1197 = vpack.c.b16 %v889, %v885
    %v1198 = vpack.c.b16 %v890, %v886
    %v1199 = vpack.c.b16 %v895, %v891
    %v1200 = vpack.c.b16 %v896, %v892
    %v1201 = vpack.c.b16 %v897, %v893
    %v1202 = vpack.c.b16 %v898, %v894
    %v1203 = vpack.c.b16 %v903, %v899
    %v1204 = vpack.c.b16 %v904, %v900
    %v1205 = vpack.c.b16 %v905, %v901
    %v1206 = vpack.c.b16 %v906, %v902
    %v1207 = vpack.c.b16 %v911, %v907
    %v1208 = vpack.c.b16 %v912, %v908
    %v1209 = vpack.c.b16 %v913, %v909
    %v1210 = vpack.c.b16 %v914, %v910
    %v1211 = vpack.c.b16 %v919, %v915
    %v1212 = vpack.c.b16 %v920, %v916
    %v1213 = vpack.c.b16 %v921, %v917
    %v1214 = vpack.c.b16 %v922, %v918
    %v1215 = vpack.c.b16 %v927, %v923
    %v1216 = vpack.c.b16 %v928, %v924
    %v1217 = vpack.c.b16 %v929, %v925
    %v1218 = vpack.c.b16 %v930, %v926
    %v1219 = vpack.c.b16 %v935, %v931
    %v1220 = vpack.c.b16 %v936, %v932
    %v1221 = vpack.c.b16 %v937, %v933
    %v1222 = vpack.c.b16 %v938, %v934
    %v1223 = vpack.c.b16 %v943, %v939
    %v1224 = vpack.c.b16 %v944, %v940
    %v1225 = vpack.c.b16 %v945, %v941
    %v1226 = vpack.c.b16 %v946, %v942
    %v1227 = vpack.c.b16 %v951, %v947
    %v1228 = vpack.c.b16 %v952, %v948
    %v1229 = vpack.c.b16 %v953, %v949
    %v1230 = vpack.c.b16 %v954, %v950
    %v1231 = vpack.c.b16 %v959, %v955
    %v1232 = vpack.c.b16 %v960, %v956
    %v1233 = vpack.c.b16 %v961, %v957
    %v1234 = vpack.c.b16 %v962, %v958
    %v1235 = vpack.c.b16 %v967, %v963
    %v1236 = vpack.c.b16 %v968, %v964
    %v1237 = vpack.c.b16 %v969, %v965
    %v1238 = vpack.c.b16 %v970, %v966
    %v1239 = vpack.c.b16 %v975, %v971
    %v1240 = vpack.c.b16 %v976, %v972
    %v1241 = vpack.c.b16 %v977, %v973
    %v1242 = vpack.c.b16 %v978, %v974
    %v1243 = vpack.c.b16 %v983, %v979
    %v1244 = vpack.c.b16 %v984, %v980
    %v1245 = vpack.c.b16 %v985, %v981
    %v1246 = vpack.c.b16 %v986, %v982
    %v1247 = vpack.c.b16 %v991, %v987
    %v1248 = vpack.c.b16 %v992, %v988
    %v1249 = vpack.c.b16 %v993, %v989
    %v1250 = vpack.c.b16 %v994, %v990
    %v1251 = vpack.c.b16 %v999, %v995
    %v1252 = vpack.c.b16 %v1000, %v996
    %v1253 = vpack.c.b16 %v1001, %v997
    %v1254 = vpack.c.b16 %v1002, %v998
    %v1255 = vpack.c.b16 %v1007, %v1003
    %v1256 = vpack.c.b16 %v1008, %v1004
    %v1257 = vpack.c.b16 %v1009, %v1005
    %v1258 = vpack.c.b16 %v1010, %v1006
    %v1259 = vpack.c.b16 %v1015, %v1011
    %v1260 = vpack.c.b16 %v1016, %v1012
    %v1261 = vpack.c.b16 %v1017, %v1013
    %v1262 = vpack.c.b16 %v1018, %v1014
    %v1263 = vpack.c.b16 %v1023, %v1019
    %v1264 = vpack.c.b16 %v1024, %v1020
    %v1265 = vpack.c.b16 %v1025, %v1021
    %v1266 = vpack.c.b16 %v1026, %v1022
    %v1267 = vpack.c.b16 %v1031, %v1027
    %v1268 = vpack.c.b16 %v1032, %v1028
    %v1269 = vpack.c.b16 %v1033, %v1029
    %v1270 = vpack.c.b16 %v1034, %v1030
    %v1271 = vpack.c.b16 %v1039, %v1035
    %v1272 = vpack.c.b16 %v1040, %v1036
    %v1273 = vpack.c.b16 %v1041, %v1037
    %v1274 = vpack.c.b16 %v1042, %v1038
    %v1275 = vpack.c.b16 %v1047, %v1043
    %v1276 = vpack.c.b16 %v1048, %v1044
    %v1277 = vpack.c.b16 %v1049, %v1045
    %v1278 = vpack.c.b16 %v1050, %v1046
    %v1279 = vpack.c.b16 %v1055, %v1051
    %v1280 = vpack.c.b16 %v1056, %v1052
    %v1281 = vpack.c.b16 %v1057, %v1053
    %v1282 = vpack.c.b16 %v1058, %v1054
    %1507 = vmatprep.subr.bf16.mxu0 %v1088
    %1508 = vmatpush1.bf16.msra.mxu0 %v1087
    %1509 = vmatprep.subr.bf16.mxu0 %v1084
    %1510 = vmatpush1.bf16.msra.mxu0 %v1083
    %1511 = vmatprep.subr.bf16.mxu0 %v1080
    %1512 = vmatpush1.bf16.msra.mxu0 %v1079
    %1513 = vmatprep.subr.bf16.mxu0 %v1076
    %1514 = vmatpush1.bf16.msra.mxu0 %v1075
    %1515 = vmatprep.subr.bf16.mxu0 %v1072
    %1516 = vmatpush1.bf16.msra.mxu0 %v1071
    %1517 = vmatprep.subr.bf16.mxu0 %v1068
    %1518 = vmatpush1.bf16.msra.mxu0 %v1067
    %1519 = vmatprep.subr.bf16.mxu0 %v1064
    %1520 = vmatpush1.bf16.msra.mxu0 %v1063
    %1521 = vmatprep.subr.bf16.mxu0 %v1060
    %1522 = vmatpush1.bf16.msra.mxu0 %v1059
    %1523 = vmatprep.subr.bf16.mxu0 %v1120
    %1524 = vmatpush2.bf16.msra.mxu0 %v1119
    %1525 = vmatprep.subr.bf16.mxu0 %v1116
    %1526 = vmatpush2.bf16.msra.mxu0 %v1115
    %1527 = vmatprep.subr.bf16.mxu0 %v1112
    %1528 = vmatpush2.bf16.msra.mxu0 %v1111
    %1529 = vmatprep.subr.bf16.mxu0 %v1108
    %1530 = vmatpush2.bf16.msra.mxu0 %v1107
    %1531 = vmatprep.subr.bf16.mxu0 %v1104
    %1532 = vmatpush2.bf16.msra.mxu0 %v1103
    %1533 = vmatprep.subr.bf16.mxu0 %v1100
    %1534 = vmatpush2.bf16.msra.mxu0 %v1099
    %1535 = vmatprep.subr.bf16.mxu0 %v1096
    %1536 = vmatpush2.bf16.msra.mxu0 %v1095
    %1537 = vmatprep.subr.bf16.mxu0 %v1092
    %1538 = vmatpush2.bf16.msra.mxu0 %v1091
    %1539 = vmatprep.mubr.bf16.mxu0 %v374
    %1540 = vmatmul.mubr.bf16.gmra.mxu0 %v373
    %v1541 = vpop.f32.mrf.mxu0
    %v1542 = vadd.f32 %v345, %v1541
    %v1543 = vpop.f32.mrf.mxu0
    %v1544 = vadd.f32 %v349, %v1543
    %v1545 = vpop.f32.mrf.mxu0
    %v1546 = vpop.f32.mrf.mxu0
    %1547 = vdwg.mxu0
    %1548 = vmatprep.subr.bf16.mxu0 %v1152
    %1549 = vmatpush1.bf16.msra.mxu0 %v1151
    %1550 = vmatprep.subr.bf16.mxu0 %v1148
    %1551 = vmatpush1.bf16.msra.mxu0 %v1147
    %1552 = vmatprep.subr.bf16.mxu0 %v1144
    %1553 = vmatpush1.bf16.msra.mxu0 %v1143
    %1554 = vmatprep.subr.bf16.mxu0 %v1140
    %1555 = vmatpush1.bf16.msra.mxu0 %v1139
    %1556 = vmatprep.subr.bf16.mxu0 %v1136
    %1557 = vmatpush1.bf16.msra.mxu0 %v1135
    %1558 = vmatprep.subr.bf16.mxu0 %v1132
    %1559 = vmatpush1.bf16.msra.mxu0 %v1131
    %1560 = vmatprep.subr.bf16.mxu0 %v1128
    %1561 = vmatpush1.bf16.msra.mxu0 %v1127
    %1562 = vmatprep.subr.bf16.mxu0 %v1124
    %1563 = vmatpush1.bf16.msra.mxu0 %v1123
    %1564 = vmatprep.subr.bf16.mxu0 %v1184
    %1565 = vmatpush2.bf16.msra.mxu0 %v1183
    %1566 = vmatprep.subr.bf16.mxu0 %v1180
    %1567 = vmatpush2.bf16.msra.mxu0 %v1179
    %1568 = vmatprep.subr.bf16.mxu0 %v1176
    %1569 = vmatpush2.bf16.msra.mxu0 %v1175
    %1570 = vmatprep.subr.bf16.mxu0 %v1172
    %1571 = vmatpush2.bf16.msra.mxu0 %v1171
    %1572 = vmatprep.subr.bf16.mxu0 %v1168
    %1573 = vmatpush2.bf16.msra.mxu0 %v1167
    %1574 = vmatprep.subr.bf16.mxu0 %v1164
    %1575 = vmatpush2.bf16.msra.mxu0 %v1163
    %1576 = vmatprep.subr.bf16.mxu0 %v1160
    %1577 = vmatpush2.bf16.msra.mxu0 %v1159
    %1578 = vmatprep.subr.bf16.mxu0 %v1156
    %1579 = vmatpush2.bf16.msra.mxu0 %v1155
    %1580 = vmatprep.mubr.bf16.mxu0 %v376
    %1581 = vmatmul.mubr.bf16.gmra.mxu0 %v375
    %v1582 = vpop.f32.mrf.mxu0
    %v1583 = vadd.f32 %v1542, %v1582
    %v1584 = vpop.f32.mrf.mxu0
    %v1585 = vadd.f32 %v1544, %v1584
    %v1586 = vpop.f32.mrf.mxu0
    %v1587 = vpop.f32.mrf.mxu0
    %1588 = vdwg.mxu0
    %1589 = vmatprep.subr.bf16.mxu0 %v1216
    %1590 = vmatpush1.bf16.msra.mxu0 %v1215
    %1591 = vmatprep.subr.bf16.mxu0 %v1212
    %1592 = vmatpush1.bf16.msra.mxu0 %v1211
    %1593 = vmatprep.subr.bf16.mxu0 %v1208
    %1594 = vmatpush1.bf16.msra.mxu0 %v1207
    %1595 = vmatprep.subr.bf16.mxu0 %v1204
    %1596 = vmatpush1.bf16.msra.mxu0 %v1203
    %1597 = vmatprep.subr.bf16.mxu0 %v1200
    %1598 = vmatpush1.bf16.msra.mxu0 %v1199
    %1599 = vmatprep.subr.bf16.mxu0 %v1196
    %1600 = vmatpush1.bf16.msra.mxu0 %v1195
    %1601 = vmatprep.subr.bf16.mxu0 %v1192
    %1602 = vmatpush1.bf16.msra.mxu0 %v1191
    %1603 = vmatprep.subr.bf16.mxu0 %v1188
    %1604 = vmatpush1.bf16.msra.mxu0 %v1187
    %1605 = vmatprep.subr.bf16.mxu0 %v1248
    %1606 = vmatpush2.bf16.msra.mxu0 %v1247
    %1607 = vmatprep.subr.bf16.mxu0 %v1244
    %1608 = vmatpush2.bf16.msra.mxu0 %v1243
    %1609 = vmatprep.subr.bf16.mxu0 %v1240
    %1610 = vmatpush2.bf16.msra.mxu0 %v1239
    %1611 = vmatprep.subr.bf16.mxu0 %v1236
    %1612 = vmatpush2.bf16.msra.mxu0 %v1235
    %1613 = vmatprep.subr.bf16.mxu0 %v1232
    %1614 = vmatpush2.bf16.msra.mxu0 %v1231
    %1615 = vmatprep.subr.bf16.mxu0 %v1228
    %1616 = vmatpush2.bf16.msra.mxu0 %v1227
    %1617 = vmatprep.subr.bf16.mxu0 %v1224
    %1618 = vmatpush2.bf16.msra.mxu0 %v1223
    %1619 = vmatprep.subr.bf16.mxu0 %v1220
    %1620 = vmatpush2.bf16.msra.mxu0 %v1219
    %1621 = vmatprep.mubr.bf16.mxu0 %v378
    %1622 = vmatmul.mubr.bf16.gmra.mxu0 %v377
    %v1623 = vpop.f32.mrf.mxu0
    %v1624 = vadd.f32 %v1583, %v1623
    %v1625 = vpop.f32.mrf.mxu0
    %v1626 = vadd.f32 %v1585, %v1625
    %v1627 = vpop.f32.mrf.mxu0
    %v1628 = vpop.f32.mrf.mxu0
    %1629 = vdwg.mxu0
    %1630 = vmatprep.subr.bf16.mxu0 %v1280
    %1631 = vmatpush1.bf16.msra.mxu0 %v1279
    %1632 = vmatprep.subr.bf16.mxu0 %v1276
    %1633 = vmatpush1.bf16.msra.mxu0 %v1275
    %1634 = vmatprep.subr.bf16.mxu0 %v1272
    %1635 = vmatpush1.bf16.msra.mxu0 %v1271
    %1636 = vmatprep.subr.bf16.mxu0 %v1268
    %1637 = vmatpush1.bf16.msra.mxu0 %v1267
    %1638 = vmatprep.subr.bf16.mxu0 %v1264
    %1639 = vmatpush1.bf16.msra.mxu0 %v1263
    %1640 = vmatprep.subr.bf16.mxu0 %v1260
    %1641 = vmatpush1.bf16.msra.mxu0 %v1259
    %1642 = vmatprep.subr.bf16.mxu0 %v1256
    %1643 = vmatpush1.bf16.msra.mxu0 %v1255
    %1644 = vmatprep.subr.bf16.mxu0 %v1252
    %1645 = vmatpush1.bf16.msra.mxu0 %v1251
    %1646 = vmatprep.subr.bf16.mxu0 0
    %1647 = vmatpush2.bf16.msra.mxu0 0
    %1648 = vmatprep.subr.bf16.mxu0 0
    %1649 = vmatpush2.bf16.msra.mxu0 0
    %1650 = vmatprep.subr.bf16.mxu0 0
    %1651 = vmatpush2.bf16.msra.mxu0 0
    %1652 = vmatprep.subr.bf16.mxu0 0
    %1653 = vmatpush2.bf16.msra.mxu0 0
    %1654 = vmatprep.subr.bf16.mxu0 0
    %1655 = vmatpush2.bf16.msra.mxu0 0
    %1656 = vmatprep.subr.bf16.mxu0 0
    %1657 = vmatpush2.bf16.msra.mxu0 0
    %1658 = vmatprep.subr.bf16.mxu0 0
    %1659 = vmatpush2.bf16.msra.mxu0 0
    %1660 = vmatprep.subr.bf16.mxu0 0
    %1661 = vmatpush2.bf16.msra.mxu0 0
    %1662 = vmatprep.mubr.bf16.mxu0 0
    %1663 = vmatmul.mubr.bf16.gmra.mxu0 %v379
    %v1664 = vpop.f32.mrf.mxu0
    %v1665 = vadd.f32 %v1624, %v1664
    %v1666 = vpop.f32.mrf.mxu0
    %v1667 = vadd.f32 %v1626, %v1666
    %v1668 = vpop.f32.mrf.mxu0
    %v1669 = vpop.f32.mrf.mxu0
    %1670 = vdwg.mxu0
    %1671 = vmatprep.subr.bf16.mxu0 %v1090
    %1672 = vmatpush1.bf16.msra.mxu0 %v1089
    %1673 = vmatprep.subr.bf16.mxu0 %v1086
    %1674 = vmatpush1.bf16.msra.mxu0 %v1085
    %1675 = vmatprep.subr.bf16.mxu0 %v1082
    %1676 = vmatpush1.bf16.msra.mxu0 %v1081
    %1677 = vmatprep.subr.bf16.mxu0 %v1078
    %1678 = vmatpush1.bf16.msra.mxu0 %v1077
    %1679 = vmatprep.subr.bf16.mxu0 %v1074
    %1680 = vmatpush1.bf16.msra.mxu0 %v1073
    %1681 = vmatprep.subr.bf16.mxu0 %v1070
    %1682 = vmatpush1.bf16.msra.mxu0 %v1069
    %1683 = vmatprep.subr.bf16.mxu0 %v1066
    %1684 = vmatpush1.bf16.msra.mxu0 %v1065
    %1685 = vmatprep.subr.bf16.mxu0 %v1062
    %1686 = vmatpush1.bf16.msra.mxu0 %v1061
    %1687 = vmatprep.subr.bf16.mxu0 %v1122
    %1688 = vmatpush2.bf16.msra.mxu0 %v1121
    %1689 = vmatprep.subr.bf16.mxu0 %v1118
    %1690 = vmatpush2.bf16.msra.mxu0 %v1117
    %1691 = vmatprep.subr.bf16.mxu0 %v1114
    %1692 = vmatpush2.bf16.msra.mxu0 %v1113
    %1693 = vmatprep.subr.bf16.mxu0 %v1110
    %1694 = vmatpush2.bf16.msra.mxu0 %v1109
    %1695 = vmatprep.subr.bf16.mxu0 %v1106
    %1696 = vmatpush2.bf16.msra.mxu0 %v1105
    %1697 = vmatprep.subr.bf16.mxu0 %v1102
    %1698 = vmatpush2.bf16.msra.mxu0 %v1101
    %1699 = vmatprep.subr.bf16.mxu0 %v1098
    %1700 = vmatpush2.bf16.msra.mxu0 %v1097
    %1701 = vmatprep.subr.bf16.mxu0 %v1094
    %1702 = vmatpush2.bf16.msra.mxu0 %v1093
    %1703 = vmatprep.mubr.bf16.mxu0 %v374
    %1704 = vmatmul.mubr.bf16.gmra.mxu0 %v373
    %v1705 = vpop.f32.mrf.mxu0
    %v1706 = vadd.f32 %v353, %v1705
    %v1707 = vpop.f32.mrf.mxu0
    %v1708 = vadd.f32 %v357, %v1707
    %v1709 = vpop.f32.mrf.mxu0
    %v1710 = vpop.f32.mrf.mxu0
    %1711 = vdwg.mxu0
    %1712 = vmatprep.subr.bf16.mxu0 %v1154
    %1713 = vmatpush1.bf16.msra.mxu0 %v1153
    %1714 = vmatprep.subr.bf16.mxu0 %v1150
    %1715 = vmatpush1.bf16.msra.mxu0 %v1149
    %1716 = vmatprep.subr.bf16.mxu0 %v1146
    %1717 = vmatpush1.bf16.msra.mxu0 %v1145
    %1718 = vmatprep.subr.bf16.mxu0 %v1142
    %1719 = vmatpush1.bf16.msra.mxu0 %v1141
    %1720 = vmatprep.subr.bf16.mxu0 %v1138
    %1721 = vmatpush1.bf16.msra.mxu0 %v1137
    %1722 = vmatprep.subr.bf16.mxu0 %v1134
    %1723 = vmatpush1.bf16.msra.mxu0 %v1133
    %1724 = vmatprep.subr.bf16.mxu0 %v1130
    %1725 = vmatpush1.bf16.msra.mxu0 %v1129
    %1726 = vmatprep.subr.bf16.mxu0 %v1126
    %1727 = vmatpush1.bf16.msra.mxu0 %v1125
    %1728 = vmatprep.subr.bf16.mxu0 %v1186
    %1729 = vmatpush2.bf16.msra.mxu0 %v1185
    %1730 = vmatprep.subr.bf16.mxu0 %v1182
    %1731 = vmatpush2.bf16.msra.mxu0 %v1181
    %1732 = vmatprep.subr.bf16.mxu0 %v1178
    %1733 = vmatpush2.bf16.msra.mxu0 %v1177
    %1734 = vmatprep.subr.bf16.mxu0 %v1174
    %1735 = vmatpush2.bf16.msra.mxu0 %v1173
    %1736 = vmatprep.subr.bf16.mxu0 %v1170
    %1737 = vmatpush2.bf16.msra.mxu0 %v1169
    %1738 = vmatprep.subr.bf16.mxu0 %v1166
    %1739 = vmatpush2.bf16.msra.mxu0 %v1165
    %1740 = vmatprep.subr.bf16.mxu0 %v1162
    %1741 = vmatpush2.bf16.msra.mxu0 %v1161
    %1742 = vmatprep.subr.bf16.mxu0 %v1158
    %1743 = vmatpush2.bf16.msra.mxu0 %v1157
    %1744 = vmatprep.mubr.bf16.mxu0 %v376
    %1745 = vmatmul.mubr.bf16.gmra.mxu0 %v375
    %v1746 = vpop.f32.mrf.mxu0
    %v1747 = vadd.f32 %v1706, %v1746
    %v1748 = vpop.f32.mrf.mxu0
    %v1749 = vadd.f32 %v1708, %v1748
    %v1750 = vpop.f32.mrf.mxu0
    %v1751 = vpop.f32.mrf.mxu0
    %1752 = vdwg.mxu0
    %1753 = vmatprep.subr.bf16.mxu0 %v1218
    %1754 = vmatpush1.bf16.msra.mxu0 %v1217
    %1755 = vmatprep.subr.bf16.mxu0 %v1214
    %1756 = vmatpush1.bf16.msra.mxu0 %v1213
    %1757 = vmatprep.subr.bf16.mxu0 %v1210
    %1758 = vmatpush1.bf16.msra.mxu0 %v1209
    %1759 = vmatprep.subr.bf16.mxu0 %v1206
    %1760 = vmatpush1.bf16.msra.mxu0 %v1205
    %1761 = vmatprep.subr.bf16.mxu0 %v1202
    %1762 = vmatpush1.bf16.msra.mxu0 %v1201
    %1763 = vmatprep.subr.bf16.mxu0 %v1198
    %1764 = vmatpush1.bf16.msra.mxu0 %v1197
    %1765 = vmatprep.subr.bf16.mxu0 %v1194
    %1766 = vmatpush1.bf16.msra.mxu0 %v1193
    %1767 = vmatprep.subr.bf16.mxu0 %v1190
    %1768 = vmatpush1.bf16.msra.mxu0 %v1189
    %1769 = vmatprep.subr.bf16.mxu0 %v1250
    %1770 = vmatpush2.bf16.msra.mxu0 %v1249
    %1771 = vmatprep.subr.bf16.mxu0 %v1246
    %1772 = vmatpush2.bf16.msra.mxu0 %v1245
    %1773 = vmatprep.subr.bf16.mxu0 %v1242
    %1774 = vmatpush2.bf16.msra.mxu0 %v1241
    %1775 = vmatprep.subr.bf16.mxu0 %v1238
    %1776 = vmatpush2.bf16.msra.mxu0 %v1237
    %1777 = vmatprep.subr.bf16.mxu0 %v1234
    %1778 = vmatpush2.bf16.msra.mxu0 %v1233
    %1779 = vmatprep.subr.bf16.mxu0 %v1230
    %1780 = vmatpush2.bf16.msra.mxu0 %v1229
    %1781 = vmatprep.subr.bf16.mxu0 %v1226
    %1782 = vmatpush2.bf16.msra.mxu0 %v1225
    %1783 = vmatprep.subr.bf16.mxu0 %v1222
    %1784 = vmatpush2.bf16.msra.mxu0 %v1221
    %1785 = vmatprep.mubr.bf16.mxu0 %v378
    %1786 = vmatmul.mubr.bf16.gmra.mxu0 %v377
    %v1787 = vpop.f32.mrf.mxu0
    %v1788 = vadd.f32 %v1747, %v1787
    %v1789 = vpop.f32.mrf.mxu0
    %v1790 = vadd.f32 %v1749, %v1789
    %v1791 = vpop.f32.mrf.mxu0
    %v1792 = vpop.f32.mrf.mxu0
    %1793 = vdwg.mxu0
    %1794 = vmatprep.subr.bf16.mxu0 %v1282
    %1795 = vmatpush1.bf16.msra.mxu0 %v1281
    %1796 = vmatprep.subr.bf16.mxu0 %v1278
    %1797 = vmatpush1.bf16.msra.mxu0 %v1277
    %1798 = vmatprep.subr.bf16.mxu0 %v1274
    %1799 = vmatpush1.bf16.msra.mxu0 %v1273
    %1800 = vmatprep.subr.bf16.mxu0 %v1270
    %1801 = vmatpush1.bf16.msra.mxu0 %v1269
    %1802 = vmatprep.subr.bf16.mxu0 %v1266
    %1803 = vmatpush1.bf16.msra.mxu0 %v1265
    %1804 = vmatprep.subr.bf16.mxu0 %v1262
    %1805 = vmatpush1.bf16.msra.mxu0 %v1261
    %1806 = vmatprep.subr.bf16.mxu0 %v1258
    %1807 = vmatpush1.bf16.msra.mxu0 %v1257
    %1808 = vmatprep.subr.bf16.mxu0 %v1254
    %1809 = vmatpush1.bf16.msra.mxu0 %v1253
    %1810 = vmatprep.subr.bf16.mxu0 0
    %1811 = vmatpush2.bf16.msra.mxu0 0
    %1812 = vmatprep.subr.bf16.mxu0 0
    %1813 = vmatpush2.bf16.msra.mxu0 0
    %1814 = vmatprep.subr.bf16.mxu0 0
    %1815 = vmatpush2.bf16.msra.mxu0 0
    %1816 = vmatprep.subr.bf16.mxu0 0
    %1817 = vmatpush2.bf16.msra.mxu0 0
    %1818 = vmatprep.subr.bf16.mxu0 0
    %1819 = vmatpush2.bf16.msra.mxu0 0
    %1820 = vmatprep.subr.bf16.mxu0 0
    %1821 = vmatpush2.bf16.msra.mxu0 0
    %1822 = vmatprep.subr.bf16.mxu0 0
    %1823 = vmatpush2.bf16.msra.mxu0 0
    %1824 = vmatprep.subr.bf16.mxu0 0
    %1825 = vmatpush2.bf16.msra.mxu0 0
    %1826 = vmatprep.mubr.bf16.mxu0 0
    %1827 = vmatmul.mubr.bf16.gmra.mxu0 %v379
    %v1828 = vpop.f32.mrf.mxu0
    %v1829 = vadd.f32 %v1788, %v1828
    %v1830 = vpop.f32.mrf.mxu0
    %v1831 = vadd.f32 %v1790, %v1830
    %v1832 = vpop.f32.mrf.mxu0
    %v1833 = vpop.f32.mrf.mxu0
    %1834 = vdwg.mxu0
    %v1835 = vmax.f32 %v1665, 0.0
    %v1836 = vmax.f32 %v1667, 0.0
    %v1837 = vmax.f32 %v1829, 0.0
    %v1838 = vmax.f32 %v1831, 0.0
    %v1839 = vpack.c.bf16 %v1835, %v1835
    %v1840 = vpack.c.bf16 %v1836, %v1836
    %v1841 = vpack.c.bf16 %v1837, %v1837
    %v1842 = vpack.c.bf16 %v1838, %v1838
    %v1843 = vld [vmem:[#allocation8] sm:$0xff]
    %v1844 = vld [vmem:[#allocation8 + $0x8] sm:$0xff]
    %v1845 = vld [vmem:[#allocation8 + $0x10] sm:$0xff]
    %v1846 = vld [vmem:[#allocation8 + $0x18] sm:$0xff]
    %v1847 = vld [vmem:[#allocation8 + $0x20] sm:$0xff]
    %v1848 = vld [vmem:[#allocation8 + $0x28] sm:$0xff]
    %v1849 = vld [vmem:[#allocation8 + $0x30] sm:$0xff]
    %v1850 = vld [vmem:[#allocation8 + $0x38] sm:$0xff]
    %v1851 = vld [vmem:[#allocation8 + $0x40] sm:$0xff]
    %v1852 = vld [vmem:[#allocation8 + $0x48] sm:$0xff]
    %v1853 = vld [vmem:[#allocation8 + $0x50] sm:$0xff]
    %v1854 = vld [vmem:[#allocation8 + $0x58] sm:$0xff]
    %v1855 = vld [vmem:[#allocation8 + $0x60] sm:$0xff]
    %v1856 = vld [vmem:[#allocation8 + $0x68] sm:$0xff]
    %v1857 = vld [vmem:[#allocation8 + $0x70] sm:$0xff]
    %v1858 = vld [vmem:[#allocation8 + $0x78] sm:$0xff]
    %v1859 = vld [vmem:[#allocation8 + $0x80] sm:$0xff]
    %v1860 = vld [vmem:[#allocation8 + $0x88] sm:$0xff]
    %v1861 = vld [vmem:[#allocation8 + $0x90] sm:$0xff]
    %v1862 = vld [vmem:[#allocation8 + $0x98] sm:$0xff]
    %v1863 = vld [vmem:[#allocation8 + $0xa0] sm:$0xff]
    %v1864 = vld [vmem:[#allocation8 + $0xa8] sm:$0xff]
    %v1865 = vld [vmem:[#allocation8 + $0xb0] sm:$0xff]
    %v1866 = vld [vmem:[#allocation8 + $0xb8] sm:$0xff]
    %v1867 = vld [vmem:[#allocation8 + $0xc0] sm:$0xff]
    %v1868 = vld [vmem:[#allocation8 + $0xc8] sm:$0xff]
    %v1869 = vld [vmem:[#allocation8 + $0xd0] sm:$0xff]
    %v1870 = vld [vmem:[#allocation8 + $0xd8] sm:$0xff]
    %v1871 = vld [vmem:[#allocation8 + $0xe0] sm:$0xff]
    %v1872 = vld [vmem:[#allocation8 + $0xe8] sm:$0xff]
    %v1873 = vld [vmem:[#allocation8 + $0xf0] sm:$0xff]
    %v1874 = vld [vmem:[#allocation8 + $0xf8] sm:$0xff]
    %v1875 = vld [vmem:[#allocation8 + $0x100] sm:$0xff]
    %v1876 = vld [vmem:[#allocation8 + $0x108] sm:$0xff]
    %v1877 = vld [vmem:[#allocation8 + $0x110] sm:$0xff]
    %v1878 = vld [vmem:[#allocation8 + $0x118] sm:$0xff]
    %v1879 = vld [vmem:[#allocation8 + $0x120] sm:$0xff]
    %v1880 = vld [vmem:[#allocation8 + $0x128] sm:$0xff]
    %v1881 = vld [vmem:[#allocation8 + $0x130] sm:$0xff]
    %v1882 = vld [vmem:[#allocation8 + $0x138] sm:$0xff]
    %v1883 = vld [vmem:[#allocation8 + $0x140] sm:$0xff]
    %v1884 = vld [vmem:[#allocation8 + $0x148] sm:$0xff]
    %v1885 = vld [vmem:[#allocation8 + $0x150] sm:$0xff]
    %v1886 = vld [vmem:[#allocation8 + $0x158] sm:$0xff]
    %v1887 = vld [vmem:[#allocation8 + $0x160] sm:$0xff]
    %v1888 = vld [vmem:[#allocation8 + $0x168] sm:$0xff]
    %v1889 = vld [vmem:[#allocation8 + $0x170] sm:$0xff]
    %v1890 = vld [vmem:[#allocation8 + $0x178] sm:$0xff]
    %v1891 = vld [vmem:[#allocation8 + $0x180] sm:$0xff]
    %v1892 = vld [vmem:[#allocation8 + $0x188] sm:$0xff]
    %v1893 = vld [vmem:[#allocation8 + $0x190] sm:$0xff]
    %v1894 = vld [vmem:[#allocation8 + $0x198] sm:$0xff]
    %v1895 = vld [vmem:[#allocation8 + $0x1a0] sm:$0xff]
    %v1896 = vld [vmem:[#allocation8 + $0x1a8] sm:$0xff]
    %v1897 = vld [vmem:[#allocation8 + $0x1b0] sm:$0xff]
    %v1898 = vld [vmem:[#allocation8 + $0x1b8] sm:$0xff]
    %v1899 = vld [vmem:[#allocation8 + $0x1c0] sm:$0xff]
    %v1900 = vld [vmem:[#allocation8 + $0x1c8] sm:$0xff]
    %v1901 = vld [vmem:[#allocation8 + $0x1d0] sm:$0xff]
    %v1902 = vld [vmem:[#allocation8 + $0x1d8] sm:$0xff]
    %v1903 = vld [vmem:[#allocation8 + $0x1e0] sm:$0xff]
    %v1904 = vld [vmem:[#allocation8 + $0x1e8] sm:$0xff]
    %v1905 = vld [vmem:[#allocation8 + $0x1f0] sm:$0xff]
    %v1906 = vld [vmem:[#allocation8 + $0x1f8] sm:$0xff]
    %v1907 = vld [vmem:[%s4] sm:$0x3]
    %v1909 = vlaneseq
    %v1910 = vshrl.u32 %v1909, 7
    %v1911 = vsub.s32 0, %v1910
    %v1912 = vrot.slane %v1907, %v1911
    %v1913 = vlaneseq
    %v1914 = vshrl.u32 %v1913, 7
    %v1915 = vsub.s32 1, %v1914
    %v1916 = vrot.slane %v1907, %v1915
    %v1983 = vunpack.c.l.b16 %v1843
    %v1984 = vunpack.c.h.b16 %v1843
    %v1985 = vunpack.c.l.b16 %v1844
    %v1986 = vunpack.c.h.b16 %v1844
    %v1987 = vunpack.c.l.b16 %v1845
    %v1988 = vunpack.c.h.b16 %v1845
    %v1989 = vunpack.c.l.b16 %v1846
    %v1990 = vunpack.c.h.b16 %v1846
    %v1991 = vunpack.c.l.b16 %v1847
    %v1992 = vunpack.c.h.b16 %v1847
    %v1993 = vunpack.c.l.b16 %v1848
    %v1994 = vunpack.c.h.b16 %v1848
    %v1995 = vunpack.c.l.b16 %v1849
    %v1996 = vunpack.c.h.b16 %v1849
    %v1997 = vunpack.c.l.b16 %v1850
    %v1998 = vunpack.c.h.b16 %v1850
    %v1999 = vunpack.c.l.b16 %v1851
    %v2000 = vunpack.c.h.b16 %v1851
    %v2001 = vunpack.c.l.b16 %v1852
    %v2002 = vunpack.c.h.b16 %v1852
    %v2003 = vunpack.c.l.b16 %v1853
    %v2004 = vunpack.c.h.b16 %v1853
    %v2005 = vunpack.c.l.b16 %v1854
    %v2006 = vunpack.c.h.b16 %v1854
    %v2007 = vunpack.c.l.b16 %v1855
    %v2008 = vunpack.c.h.b16 %v1855
    %v2009 = vunpack.c.l.b16 %v1856
    %v2010 = vunpack.c.h.b16 %v1856
    %v2011 = vunpack.c.l.b16 %v1857
    %v2012 = vunpack.c.h.b16 %v1857
    %v2013 = vunpack.c.l.b16 %v1858
    %v2014 = vunpack.c.h.b16 %v1858
    %v2015 = vunpack.c.l.b16 %v1859
    %v2016 = vunpack.c.h.b16 %v1859
    %v2017 = vunpack.c.l.b16 %v1860
    %v2018 = vunpack.c.h.b16 %v1860
    %v2019 = vunpack.c.l.b16 %v1861
    %v2020 = vunpack.c.h.b16 %v1861
    %v2021 = vunpack.c.l.b16 %v1862
    %v2022 = vunpack.c.h.b16 %v1862
    %v2023 = vunpack.c.l.b16 %v1863
    %v2024 = vunpack.c.h.b16 %v1863
    %v2025 = vunpack.c.l.b16 %v1864
    %v2026 = vunpack.c.h.b16 %v1864
    %v2027 = vunpack.c.l.b16 %v1865
    %v2028 = vunpack.c.h.b16 %v1865
    %v2029 = vunpack.c.l.b16 %v1866
    %v2030 = vunpack.c.h.b16 %v1866
    %v2031 = vunpack.c.l.b16 %v1867
    %v2032 = vunpack.c.h.b16 %v1867
    %v2033 = vunpack.c.l.b16 %v1868
    %v2034 = vunpack.c.h.b16 %v1868
    %v2035 = vunpack.c.l.b16 %v1869
    %v2036 = vunpack.c.h.b16 %v1869
    %v2037 = vunpack.c.l.b16 %v1870
    %v2038 = vunpack.c.h.b16 %v1870
    %v2039 = vunpack.c.l.b16 %v1871
    %v2040 = vunpack.c.h.b16 %v1871
    %v2041 = vunpack.c.l.b16 %v1872
    %v2042 = vunpack.c.h.b16 %v1872
    %v2043 = vunpack.c.l.b16 %v1873
    %v2044 = vunpack.c.h.b16 %v1873
    %v2045 = vunpack.c.l.b16 %v1874
    %v2046 = vunpack.c.h.b16 %v1874
    %v2047 = vunpack.c.l.b16 %v1875
    %v2048 = vunpack.c.h.b16 %v1875
    %v2049 = vunpack.c.l.b16 %v1876
    %v2050 = vunpack.c.h.b16 %v1876
    %v2051 = vunpack.c.l.b16 %v1877
    %v2052 = vunpack.c.h.b16 %v1877
    %v2053 = vunpack.c.l.b16 %v1878
    %v2054 = vunpack.c.h.b16 %v1878
    %v2055 = vunpack.c.l.b16 %v1879
    %v2056 = vunpack.c.h.b16 %v1879
    %v2057 = vunpack.c.l.b16 %v1880
    %v2058 = vunpack.c.h.b16 %v1880
    %v2059 = vunpack.c.l.b16 %v1881
    %v2060 = vunpack.c.h.b16 %v1881
    %v2061 = vunpack.c.l.b16 %v1882
    %v2062 = vunpack.c.h.b16 %v1882
    %v2063 = vunpack.c.l.b16 %v1883
    %v2064 = vunpack.c.h.b16 %v1883
    %v2065 = vunpack.c.l.b16 %v1884
    %v2066 = vunpack.c.h.b16 %v1884
    %v2067 = vunpack.c.l.b16 %v1885
    %v2068 = vunpack.c.h.b16 %v1885
    %v2069 = vunpack.c.l.b16 %v1886
    %v2070 = vunpack.c.h.b16 %v1886
    %v2071 = vunpack.c.l.b16 %v1887
    %v2072 = vunpack.c.h.b16 %v1887
    %v2073 = vunpack.c.l.b16 %v1888
    %v2074 = vunpack.c.h.b16 %v1888
    %v2075 = vunpack.c.l.b16 %v1889
    %v2076 = vunpack.c.h.b16 %v1889
    %v2077 = vunpack.c.l.b16 %v1890
    %v2078 = vunpack.c.h.b16 %v1890
    %v2079 = vunpack.c.l.b16 %v1891
    %v2080 = vunpack.c.h.b16 %v1891
    %v2081 = vunpack.c.l.b16 %v1892
    %v2082 = vunpack.c.h.b16 %v1892
    %v2083 = vunpack.c.l.b16 %v1893
    %v2084 = vunpack.c.h.b16 %v1893
    %v2085 = vunpack.c.l.b16 %v1894
    %v2086 = vunpack.c.h.b16 %v1894
    %v2087 = vunpack.c.l.b16 %v1895
    %v2088 = vunpack.c.h.b16 %v1895
    %v2089 = vunpack.c.l.b16 %v1896
    %v2090 = vunpack.c.h.b16 %v1896
    %v2091 = vunpack.c.l.b16 %v1897
    %v2092 = vunpack.c.h.b16 %v1897
    %v2093 = vunpack.c.l.b16 %v1898
    %v2094 = vunpack.c.h.b16 %v1898
    %v2095 = vunpack.c.l.b16 %v1899
    %v2096 = vunpack.c.h.b16 %v1899
    %v2097 = vunpack.c.l.b16 %v1900
    %v2098 = vunpack.c.h.b16 %v1900
    %v2099 = vunpack.c.l.b16 %v1901
    %v2100 = vunpack.c.h.b16 %v1901
    %v2101 = vunpack.c.l.b16 %v1902
    %v2102 = vunpack.c.h.b16 %v1902
    %v2103 = vunpack.c.l.b16 %v1903
    %v2104 = vunpack.c.h.b16 %v1903
    %v2105 = vunpack.c.l.b16 %v1904
    %v2106 = vunpack.c.h.b16 %v1904
    %v2107 = vunpack.c.l.b16 %v1905
    %v2108 = vunpack.c.h.b16 %v1905
    %v2109 = vunpack.c.l.b16 %v1906
    %v2110 = vunpack.c.h.b16 %v1906
    %v2111 = vpack.c.b16 %v1985, %v1983
    %v2112 = vpack.c.b16 %v1986, %v1984
    %v2113 = vpack.c.b16 %v1989, %v1987
    %v2114 = vpack.c.b16 %v1990, %v1988
    %v2115 = vpack.c.b16 %v1993, %v1991
    %v2116 = vpack.c.b16 %v1994, %v1992
    %v2117 = vpack.c.b16 %v1997, %v1995
    %v2118 = vpack.c.b16 %v1998, %v1996
    %v2119 = vpack.c.b16 %v2001, %v1999
    %v2120 = vpack.c.b16 %v2002, %v2000
    %v2121 = vpack.c.b16 %v2005, %v2003
    %v2122 = vpack.c.b16 %v2006, %v2004
    %v2123 = vpack.c.b16 %v2009, %v2007
    %v2124 = vpack.c.b16 %v2010, %v2008
    %v2125 = vpack.c.b16 %v2013, %v2011
    %v2126 = vpack.c.b16 %v2014, %v2012
    %v2127 = vpack.c.b16 %v2017, %v2015
    %v2128 = vpack.c.b16 %v2018, %v2016
    %v2129 = vpack.c.b16 %v2021, %v2019
    %v2130 = vpack.c.b16 %v2022, %v2020
    %v2131 = vpack.c.b16 %v2025, %v2023
    %v2132 = vpack.c.b16 %v2026, %v2024
    %v2133 = vpack.c.b16 %v2029, %v2027
    %v2134 = vpack.c.b16 %v2030, %v2028
    %v2135 = vpack.c.b16 %v2033, %v2031
    %v2136 = vpack.c.b16 %v2034, %v2032
    %v2137 = vpack.c.b16 %v2037, %v2035
    %v2138 = vpack.c.b16 %v2038, %v2036
    %v2139 = vpack.c.b16 %v2041, %v2039
    %v2140 = vpack.c.b16 %v2042, %v2040
    %v2141 = vpack.c.b16 %v2045, %v2043
    %v2142 = vpack.c.b16 %v2046, %v2044
    %v2143 = vpack.c.b16 %v2049, %v2047
    %v2144 = vpack.c.b16 %v2050, %v2048
    %v2145 = vpack.c.b16 %v2053, %v2051
    %v2146 = vpack.c.b16 %v2054, %v2052
    %v2147 = vpack.c.b16 %v2057, %v2055
    %v2148 = vpack.c.b16 %v2058, %v2056
    %v2149 = vpack.c.b16 %v2061, %v2059
    %v2150 = vpack.c.b16 %v2062, %v2060
    %v2151 = vpack.c.b16 %v2065, %v2063
    %v2152 = vpack.c.b16 %v2066, %v2064
    %v2153 = vpack.c.b16 %v2069, %v2067
    %v2154 = vpack.c.b16 %v2070, %v2068
    %v2155 = vpack.c.b16 %v2073, %v2071
    %v2156 = vpack.c.b16 %v2074, %v2072
    %v2157 = vpack.c.b16 %v2077, %v2075
    %v2158 = vpack.c.b16 %v2078, %v2076
    %v2159 = vpack.c.b16 %v2081, %v2079
    %v2160 = vpack.c.b16 %v2082, %v2080
    %v2161 = vpack.c.b16 %v2085, %v2083
    %v2162 = vpack.c.b16 %v2086, %v2084
    %v2163 = vpack.c.b16 %v2089, %v2087
    %v2164 = vpack.c.b16 %v2090, %v2088
    %v2165 = vpack.c.b16 %v2093, %v2091
    %v2166 = vpack.c.b16 %v2094, %v2092
    %v2167 = vpack.c.b16 %v2097, %v2095
    %v2168 = vpack.c.b16 %v2098, %v2096
    %v2169 = vpack.c.b16 %v2101, %v2099
    %v2170 = vpack.c.b16 %v2102, %v2100
    %v2171 = vpack.c.b16 %v2105, %v2103
    %v2172 = vpack.c.b16 %v2106, %v2104
    %v2173 = vpack.c.b16 %v2109, %v2107
    %v2174 = vpack.c.b16 %v2110, %v2108
    %2239 = vmatprep.subr.bf16.mxu0 %v2126
    %2240 = vmatpush1.bf16.msra.mxu0 %v2125
    %2241 = vmatprep.subr.bf16.mxu0 %v2124
    %2242 = vmatpush1.bf16.msra.mxu0 %v2123
    %2243 = vmatprep.subr.bf16.mxu0 %v2122
    %2244 = vmatpush1.bf16.msra.mxu0 %v2121
    %2245 = vmatprep.subr.bf16.mxu0 %v2120
    %2246 = vmatpush1.bf16.msra.mxu0 %v2119
    %2247 = vmatprep.subr.bf16.mxu0 %v2118
    %2248 = vmatpush1.bf16.msra.mxu0 %v2117
    %2249 = vmatprep.subr.bf16.mxu0 %v2116
    %2250 = vmatpush1.bf16.msra.mxu0 %v2115
    %2251 = vmatprep.subr.bf16.mxu0 %v2114
    %2252 = vmatpush1.bf16.msra.mxu0 %v2113
    %2253 = vmatprep.subr.bf16.mxu0 %v2112
    %2254 = vmatpush1.bf16.msra.mxu0 %v2111
    %2255 = vmatprep.subr.bf16.mxu0 %v2142
    %2256 = vmatpush2.bf16.msra.mxu0 %v2141
    %2257 = vmatprep.subr.bf16.mxu0 %v2140
    %2258 = vmatpush2.bf16.msra.mxu0 %v2139
    %2259 = vmatprep.subr.bf16.mxu0 %v2138
    %2260 = vmatpush2.bf16.msra.mxu0 %v2137
    %2261 = vmatprep.subr.bf16.mxu0 %v2136
    %2262 = vmatpush2.bf16.msra.mxu0 %v2135
    %2263 = vmatprep.subr.bf16.mxu0 %v2134
    %2264 = vmatpush2.bf16.msra.mxu0 %v2133
    %2265 = vmatprep.subr.bf16.mxu0 %v2132
    %2266 = vmatpush2.bf16.msra.mxu0 %v2131
    %2267 = vmatprep.subr.bf16.mxu0 %v2130
    %2268 = vmatpush2.bf16.msra.mxu0 %v2129
    %2269 = vmatprep.subr.bf16.mxu0 %v2128
    %2270 = vmatpush2.bf16.msra.mxu0 %v2127
    %2271 = vmatprep.mubr.bf16.mxu0 %v1840
    %2272 = vmatmul.mubr.bf16.gmra.mxu0 %v1839
    %v2273 = vpop.f32.mrf.mxu0
    %v2274 = vadd.f32 %v1912, %v2273
    %v2275 = vpop.f32.mrf.mxu0
    %v2276 = vadd.f32 %v1916, %v2275
    %v2277 = vpop.f32.mrf.mxu0
    %v2278 = vpop.f32.mrf.mxu0
    %2279 = vdwg.mxu0
    %2280 = vmatprep.subr.bf16.mxu0 %v2158
    %2281 = vmatpush1.bf16.msra.mxu0 %v2157
    %2282 = vmatprep.subr.bf16.mxu0 %v2156
    %2283 = vmatpush1.bf16.msra.mxu0 %v2155
    %2284 = vmatprep.subr.bf16.mxu0 %v2154
    %2285 = vmatpush1.bf16.msra.mxu0 %v2153
    %2286 = vmatprep.subr.bf16.mxu0 %v2152
    %2287 = vmatpush1.bf16.msra.mxu0 %v2151
    %2288 = vmatprep.subr.bf16.mxu0 %v2150
    %2289 = vmatpush1.bf16.msra.mxu0 %v2149
    %2290 = vmatprep.subr.bf16.mxu0 %v2148
    %2291 = vmatpush1.bf16.msra.mxu0 %v2147
    %2292 = vmatprep.subr.bf16.mxu0 %v2146
    %2293 = vmatpush1.bf16.msra.mxu0 %v2145
    %2294 = vmatprep.subr.bf16.mxu0 %v2144
    %2295 = vmatpush1.bf16.msra.mxu0 %v2143
    %2296 = vmatprep.subr.bf16.mxu0 %v2174
    %2297 = vmatpush2.bf16.msra.mxu0 %v2173
    %2298 = vmatprep.subr.bf16.mxu0 %v2172
    %2299 = vmatpush2.bf16.msra.mxu0 %v2171
    %2300 = vmatprep.subr.bf16.mxu0 %v2170
    %2301 = vmatpush2.bf16.msra.mxu0 %v2169
    %2302 = vmatprep.subr.bf16.mxu0 %v2168
    %2303 = vmatpush2.bf16.msra.mxu0 %v2167
    %2304 = vmatprep.subr.bf16.mxu0 %v2166
    %2305 = vmatpush2.bf16.msra.mxu0 %v2165
    %2306 = vmatprep.subr.bf16.mxu0 %v2164
    %2307 = vmatpush2.bf16.msra.mxu0 %v2163
    %2308 = vmatprep.subr.bf16.mxu0 %v2162
    %2309 = vmatpush2.bf16.msra.mxu0 %v2161
    %2310 = vmatprep.subr.bf16.mxu0 %v2160
    %2311 = vmatpush2.bf16.msra.mxu0 %v2159
    %2312 = vmatprep.mubr.bf16.mxu0 %v1842
    %2313 = vmatmul.mubr.bf16.gmra.mxu0 %v1841
    %v2314 = vpop.f32.mrf.mxu0
    %v2315 = vadd.f32 %v2274, %v2314
    %v2316 = vpop.f32.mrf.mxu0
    %v2317 = vadd.f32 %v2276, %v2316
    %v2318 = vpop.f32.mrf.mxu0
    %v2319 = vpop.f32.mrf.mxu0
    %2320 = vdwg.mxu0
    %v2321 = vmax.f32 %v2315, 0.0
    %v2322 = vmax.f32 %v2317, 0.0
    %v2323 = vpack.c.bf16 %v2321, %v2321
    %v2324 = vpack.c.bf16 %v2322, %v2322
    %v2325 = vld [vmem:[#allocation10] sm:$0xf]
    %v2326 = vld [vmem:[#allocation10 + $0x4] sm:$0xf]
    %v2327 = vld [vmem:[#allocation10 + $0x8] sm:$0xf]
    %v2328 = vld [vmem:[#allocation10 + $0xc] sm:$0xf]
    %v2329 = vld [vmem:[#allocation10 + $0x10] sm:$0xf]
    %v2330 = vld [vmem:[#allocation10 + $0x14] sm:$0xf]
    %v2331 = vld [vmem:[#allocation10 + $0x18] sm:$0xf]
    %v2332 = vld [vmem:[#allocation10 + $0x1c] sm:$0xf]
    %v2333 = vld [vmem:[#allocation10 + $0x20] sm:$0xf]
    %v2334 = vld [vmem:[#allocation10 + $0x24] sm:$0xf]
    %v2335 = vld [vmem:[#allocation10 + $0x28] sm:$0xf]
    %v2336 = vld [vmem:[#allocation10 + $0x2c] sm:$0xf]
    %v2337 = vld [vmem:[#allocation10 + $0x30] sm:$0xf]
    %v2338 = vld [vmem:[#allocation10 + $0x34] sm:$0xf]
    %v2339 = vld [vmem:[#allocation10 + $0x38] sm:$0xf]
    %v2340 = vld [vmem:[#allocation10 + $0x3c] sm:$0xf]
    %v2341 = vld [vmem:[#allocation10 + $0x40] sm:$0xf]
    %v2342 = vld [vmem:[#allocation10 + $0x44] sm:$0xf]
    %v2343 = vld [vmem:[#allocation10 + $0x48] sm:$0xf]
    %v2344 = vld [vmem:[#allocation10 + $0x4c] sm:$0xf]
    %v2345 = vld [vmem:[#allocation10 + $0x50] sm:$0xf]
    %v2346 = vld [vmem:[#allocation10 + $0x54] sm:$0xf]
    %v2347 = vld [vmem:[#allocation10 + $0x58] sm:$0xf]
    %v2348 = vld [vmem:[#allocation10 + $0x5c] sm:$0xf]
    %v2349 = vld [vmem:[#allocation10 + $0x60] sm:$0xf]
    %v2350 = vld [vmem:[#allocation10 + $0x64] sm:$0xf]
    %v2351 = vld [vmem:[#allocation10 + $0x68] sm:$0xf]
    %v2352 = vld [vmem:[#allocation10 + $0x6c] sm:$0xf]
    %v2353 = vld [vmem:[#allocation10 + $0x70] sm:$0xf]
    %v2354 = vld [vmem:[#allocation10 + $0x74] sm:$0xf]
    %v2355 = vld [vmem:[#allocation10 + $0x78] sm:$0xf]
    %v2356 = vld [vmem:[#allocation10 + $0x7c] sm:$0xf]
    %v2357 = vld [vmem:[%s6] sm:$0x1]
    %v2359 = vlaneseq
    %v2360 = vshrl.u32 %v2359, 7
    %v2361 = vsub.s32 0, %v2360
    %v2362 = vrot.slane %v2357, %v2361
    %v2396 = vunpack.c.l.b16 %v2325
    %v2397 = vunpack.c.l.b16 %v2326
    %v2398 = vunpack.c.l.b16 %v2327
    %v2399 = vunpack.c.l.b16 %v2328
    %v2400 = vunpack.c.l.b16 %v2329
    %v2401 = vunpack.c.l.b16 %v2330
    %v2402 = vunpack.c.l.b16 %v2331
    %v2403 = vunpack.c.l.b16 %v2332
    %v2404 = vunpack.c.l.b16 %v2333
    %v2405 = vunpack.c.l.b16 %v2334
    %v2406 = vunpack.c.l.b16 %v2335
    %v2407 = vunpack.c.l.b16 %v2336
    %v2408 = vunpack.c.l.b16 %v2337
    %v2409 = vunpack.c.l.b16 %v2338
    %v2410 = vunpack.c.l.b16 %v2339
    %v2411 = vunpack.c.l.b16 %v2340
    %v2412 = vunpack.c.l.b16 %v2341
    %v2413 = vunpack.c.l.b16 %v2342
    %v2414 = vunpack.c.l.b16 %v2343
    %v2415 = vunpack.c.l.b16 %v2344
    %v2416 = vunpack.c.l.b16 %v2345
    %v2417 = vunpack.c.l.b16 %v2346
    %v2418 = vunpack.c.l.b16 %v2347
    %v2419 = vunpack.c.l.b16 %v2348
    %v2420 = vunpack.c.l.b16 %v2349
    %v2421 = vunpack.c.l.b16 %v2350
    %v2422 = vunpack.c.l.b16 %v2351
    %v2423 = vunpack.c.l.b16 %v2352
    %v2424 = vunpack.c.l.b16 %v2353
    %v2425 = vunpack.c.l.b16 %v2354
    %v2426 = vunpack.c.l.b16 %v2355
    %v2427 = vunpack.c.l.b16 %v2356
    %v2428 = vpack.c.b16 %v2397, %v2396
    %v2429 = vpack.c.b16 %v2399, %v2398
    %v2430 = vpack.c.b16 %v2401, %v2400
    %v2431 = vpack.c.b16 %v2403, %v2402
    %v2432 = vpack.c.b16 %v2405, %v2404
    %v2433 = vpack.c.b16 %v2407, %v2406
    %v2434 = vpack.c.b16 %v2409, %v2408
    %v2435 = vpack.c.b16 %v2411, %v2410
    %v2436 = vpack.c.b16 %v2413, %v2412
    %v2437 = vpack.c.b16 %v2415, %v2414
    %v2438 = vpack.c.b16 %v2417, %v2416
    %v2439 = vpack.c.b16 %v2419, %v2418
    %v2440 = vpack.c.b16 %v2421, %v2420
    %v2441 = vpack.c.b16 %v2423, %v2422
    %v2442 = vpack.c.b16 %v2425, %v2424
    %v2443 = vpack.c.b16 %v2427, %v2426
    %2460 = vmatprep.subr.bf16.mxu0 0
    %2461 = vmatpush1.bf16.msra.mxu0 %v2435
    %2462 = vmatprep.subr.bf16.mxu0 0
    %2463 = vmatpush1.bf16.msra.mxu0 %v2434
    %2464 = vmatprep.subr.bf16.mxu0 0
    %2465 = vmatpush1.bf16.msra.mxu0 %v2433
    %2466 = vmatprep.subr.bf16.mxu0 0
    %2467 = vmatpush1.bf16.msra.mxu0 %v2432
    %2468 = vmatprep.subr.bf16.mxu0 0
    %2469 = vmatpush1.bf16.msra.mxu0 %v2431
    %2470 = vmatprep.subr.bf16.mxu0 0
    %2471 = vmatpush1.bf16.msra.mxu0 %v2430
    %2472 = vmatprep.subr.bf16.mxu0 0
    %2473 = vmatpush1.bf16.msra.mxu0 %v2429
    %2474 = vmatprep.subr.bf16.mxu0 0
    %2475 = vmatpush1.bf16.msra.mxu0 %v2428
    %2476 = vmatprep.subr.bf16.mxu0 0
    %2477 = vmatpush2.bf16.msra.mxu0 %v2443
    %2478 = vmatprep.subr.bf16.mxu0 0
    %2479 = vmatpush2.bf16.msra.mxu0 %v2442
    %2480 = vmatprep.subr.bf16.mxu0 0
    %2481 = vmatpush2.bf16.msra.mxu0 %v2441
    %2482 = vmatprep.subr.bf16.mxu0 0
    %2483 = vmatpush2.bf16.msra.mxu0 %v2440
    %2484 = vmatprep.subr.bf16.mxu0 0
    %2485 = vmatpush2.bf16.msra.mxu0 %v2439
    %2486 = vmatprep.subr.bf16.mxu0 0
    %2487 = vmatpush2.bf16.msra.mxu0 %v2438
    %2488 = vmatprep.subr.bf16.mxu0 0
    %2489 = vmatpush2.bf16.msra.mxu0 %v2437
    %2490 = vmatprep.subr.bf16.mxu0 0
    %2491 = vmatpush2.bf16.msra.mxu0 %v2436
    %2492 = vmatprep.mubr.bf16.mxu0 %v2324
    %2493 = vmatmul.mubr.bf16.gmra.mxu0 %v2323
    %v2494 = vpop.f32.mrf.mxu0
    %v2495 = vadd.f32 %v2362, %v2494
    %v2496 = vpop.f32.mrf.mxu0
    %v2497 = vpop.f32.mrf.mxu0
    %v2498 = vpop.f32.mrf.mxu0
    %2499 = vdwg.mxu0
    %v2500 = vmax.f32 %v2495, 0.0
    %v2501 = vpack.c.bf16 %v2500, %v2500
    %v2502 = vld [vmem:[#allocation11] sm:$0xf]
    %v2503 = vld [vmem:[#allocation11 + $0x4] sm:$0xf]
    %v2504 = vld [vmem:[#allocation11 + $0x8] sm:$0xf]
    %v2505 = vld [vmem:[#allocation11 + $0xc] sm:$0xf]
    %v2506 = vld [vmem:[#allocation11 + $0x10] sm:$0xf]
    %v2507 = vld [vmem:[#allocation11 + $0x14] sm:$0xf]
    %v2508 = vld [vmem:[#allocation11 + $0x18] sm:$0xf]
    %v2509 = vld [vmem:[#allocation11 + $0x1c] sm:$0xf]
    %v2510 = vld [vmem:[#allocation11 + $0x20] sm:$0xf]
    %v2511 = vld [vmem:[#allocation11 + $0x24] sm:$0xf]
    %v2512 = vld [vmem:[#allocation11 + $0x28] sm:$0xf]
    %v2513 = vld [vmem:[#allocation11 + $0x2c] sm:$0xf]
    %v2514 = vld [vmem:[#allocation11 + $0x30] sm:$0xf]
    %v2515 = vld [vmem:[#allocation11 + $0x34] sm:$0xf]
    %v2516 = vld [vmem:[#allocation11 + $0x38] sm:$0xf]
    %v2517 = vld [vmem:[#allocation11 + $0x3c] sm:$0xf]
    %v2518 = vld [vmem:[%s8] sm:$0x1]
    %v2520 = vlaneseq
    %v2521 = vshrl.u32 %v2520, 7
    %v2522 = vsub.s32 0, %v2521
    %v2523 = vrot.slane %v2518, %v2522
    %v2541 = vunpack.c.l.b16 %v2502
    %v2542 = vunpack.c.l.b16 %v2503
    %v2543 = vunpack.c.l.b16 %v2504
    %v2544 = vunpack.c.l.b16 %v2505
    %v2545 = vunpack.c.l.b16 %v2506
    %v2546 = vunpack.c.l.b16 %v2507
    %v2547 = vunpack.c.l.b16 %v2508
    %v2548 = vunpack.c.l.b16 %v2509
    %v2549 = vunpack.c.l.b16 %v2510
    %v2550 = vunpack.c.l.b16 %v2511
    %v2551 = vunpack.c.l.b16 %v2512
    %v2552 = vunpack.c.l.b16 %v2513
    %v2553 = vunpack.c.l.b16 %v2514
    %v2554 = vunpack.c.l.b16 %v2515
    %v2555 = vunpack.c.l.b16 %v2516
    %v2556 = vunpack.c.l.b16 %v2517
    %v2557 = vpack.c.b16 %v2542, %v2541
    %v2558 = vpack.c.b16 %v2544, %v2543
    %v2559 = vpack.c.b16 %v2546, %v2545
    %v2560 = vpack.c.b16 %v2548, %v2547
    %v2561 = vpack.c.b16 %v2550, %v2549
    %v2562 = vpack.c.b16 %v2552, %v2551
    %v2563 = vpack.c.b16 %v2554, %v2553
    %v2564 = vpack.c.b16 %v2556, %v2555
    %2573 = vmatprep.subr.bf16.mxu0 0
    %2574 = vmatpush1.bf16.msra.mxu0 %v2564
    %2575 = vmatprep.subr.bf16.mxu0 0
    %2576 = vmatpush1.bf16.msra.mxu0 %v2563
    %2577 = vmatprep.subr.bf16.mxu0 0
    %2578 = vmatpush1.bf16.msra.mxu0 %v2562
    %2579 = vmatprep.subr.bf16.mxu0 0
    %2580 = vmatpush1.bf16.msra.mxu0 %v2561
    %2581 = vmatprep.subr.bf16.mxu0 0
    %2582 = vmatpush1.bf16.msra.mxu0 %v2560
    %2583 = vmatprep.subr.bf16.mxu0 0
    %2584 = vmatpush1.bf16.msra.mxu0 %v2559
    %2585 = vmatprep.subr.bf16.mxu0 0
    %2586 = vmatpush1.bf16.msra.mxu0 %v2558
    %2587 = vmatprep.subr.bf16.mxu0 0
    %2588 = vmatpush1.bf16.msra.mxu0 %v2557
    %2589 = vmatprep.subr.bf16.mxu0 0
    %2590 = vmatpush2.bf16.msra.mxu0 0
    %2591 = vmatprep.subr.bf16.mxu0 0
    %2592 = vmatpush2.bf16.msra.mxu0 0
    %2593 = vmatprep.subr.bf16.mxu0 0
    %2594 = vmatpush2.bf16.msra.mxu0 0
    %2595 = vmatprep.subr.bf16.mxu0 0
    %2596 = vmatpush2.bf16.msra.mxu0 0
    %2597 = vmatprep.subr.bf16.mxu0 0
    %2598 = vmatpush2.bf16.msra.mxu0 0
    %2599 = vmatprep.subr.bf16.mxu0 0
    %2600 = vmatpush2.bf16.msra.mxu0 0
    %2601 = vmatprep.subr.bf16.mxu0 0
    %2602 = vmatpush2.bf16.msra.mxu0 0
    %2603 = vmatprep.subr.bf16.mxu0 0
    %2604 = vmatpush2.bf16.msra.mxu0 0
    %2605 = vmatprep.mubr.bf16.mxu0 0
    %2606 = vmatmul.mubr.bf16.gmra.mxu0 %v2501
    %v2607 = vpop.f32.mrf.mxu0
    %v2608 = vadd.f32 %v2523, %v2607
    %v2609 = vpop.f32.mrf.mxu0
    %v2610 = vpop.f32.mrf.mxu0
    %v2611 = vpop.f32.mrf.mxu0
    %2612 = vdwg.mxu0
    %v2613 = vmax.f32 %v2608, 0.0
    %v2614 = vsub.f32 0.0, %v2613
    %v2615 = vmul.f32 %v2614, 1.442695
    %v2616 = vpow.pop %v2615
    %v2617 = vadd.f32 %v2616, 1.0
    %v2618 = vrcp.pop %v2617
    %v2619 = vmul.f32 1.0, %v2618
    %2620 = vst [vmem:[#allocation13] sm:$0xff] %v2619
    // Predicated region
    $region62: #{tpu_custom_call.1} parent=1 // pred_check
      _
    $region63: #{tpu_custom_call.1} parent=1 // pred_check_branch
      %2622 = sbr.rel (0) target = $region65
    $region64: #{tpu_custom_call.1} parent=1 // pred_region
      %s2624 = ssub.s32 128, 128
      %2625 = vsyncadd [#allocation4], %s2624
      %s2627 = sshll.u32 [#allocation13], 4
      %s2628 = int_to_ptr.vmem [resolvable:$true] %s2627
      %2630 = dma.vmem_to_hbm [thread:$0]  %s2628, 128, %s9, [#allocation4]
    $region65: #{tpu_custom_call.1} parent=1 // pred_fallthru
      _
    // Predicated region
    $region66: #{tpu_custom_call.1} parent=1 // pred_check
      _
    $region67: #{tpu_custom_call.1} parent=1 // pred_check_branch
      %2632 = sbr.rel (0) target = $region69
    $region68: #{tpu_custom_call.1} parent=1 // pred_region
      %2633 = dma.done [#allocation4], 128
    $region69: #{tpu_custom_call.1} parent=1 // pred_fallthru
      _
    %2634 = vsyncpa [#allocation3], 1
    %2635 = vsyncpa [#allocation6], 1
    %2636 = vsyncpa [#allocation9], 1
    %2637 = vsyncpa [#allocation12], 1
    %2638 = vsyncpa [#allocation4], 1

</llo_original>
